<compile_context>
chip_gen: v5e
topology: v5e:2x2
jax: 0.10.0
libtpu: 0.0.40
codegen_flags: <defaults>
</compile_context>

<pallas_src>
import jax
import jax.numpy as jnp
from jax.experimental import pallas as pl
from jax.experimental.pallas import tpu as pltpu

ACTIVATION = "relu"  # opt.activation


def _act(z):
    if ACTIVATION == "relu":
        return jnp.maximum(z, 0.0)
    if ACTIVATION == "tanh":
        return jnp.tanh(z)
    if ACTIVATION == "sigmoid":
        return jax.nn.sigmoid(z)
    if ACTIVATION == "softplus":
        return jax.nn.softplus(z)
    if ACTIVATION == "softsign":
        return z / (1.0 + jnp.abs(z))
    if ACTIVATION == "logsigmoid":
        return jax.nn.log_sigmoid(z)
    raise ValueError("Invalid activation")


def decoder_kernel(x_ref, cb_ref, ab1_ref, ab2_ref, abl_ref,
                   w1_ref, w2_ref, b2_ref, wl_ref, bl_ref,
                   wlast_ref, blast_ref,
                   g1_ref, be1_ref, g2_ref, be2_ref, gl_ref, bel_ref,
                   out_ref):
    eps = 1e-5
    inv_n = 1.0 / x_ref.shape[-1]       # 1 / (B*N): BN stats are over batch & points

    def ada_bn_act(h, ab, gamma, beta):
        # One-pass global BatchNorm1d statistics over the lane axis (= batch*points).
        s1 = jnp.sum(h, axis=-1, keepdims=True)          # (C,1)  XLU reduce
        s2 = jnp.sum(h * h, axis=-1, keepdims=True)      # (C,1)  XLU reduce
        mean = s1 * inv_n
        var = s2 * inv_n - mean * mean                   # biased variance
        r = gamma * jax.lax.rsqrt(var + eps)             # (C,1), EUP rsqrt
        m = beta - mean * r                              # (C,1)
        # a*h + b*((h-mean)*r_hat + beta) == (a + b*r)*h + b*m   (fused FMA)
        a = ab[0]                                        # (C, B*N) pre-broadcast
        b = ab[1]
        return _act((a + b * r) * h + b * m)

    # conv1 (Cin = dim_template, tiny) on the VPU: broadcast FMAs, no MXU.
    x = x_ref[...]                      # (Cin, B*N)
    w1 = w1_ref[...]                    # (BNECK, Cin)
    h = cb_ref[...]                     # conv1 bias + latent, already (BNECK, B*N)
    for c in range(w1.shape[1]):        # statically unrolled (Cin == 2)
        h = h + w1[:, c:c + 1] * x[c:c + 1, :]
    h = ada_bn_act(h, ab1_ref[...], g1_ref[...], be1_ref[...])

    # conv2: one lane-dense MXU matmul over the folded (C, B*N) activations.
    h = jnp.dot(w2_ref[...], h, preferred_element_type=jnp.float32) + b2_ref[...]
    h = ada_bn_act(h, ab2_ref[...], g2_ref[...], be2_ref[...])

    # hidden stack (statically unrolled)
    for i in range(wl_ref.shape[0]):
        h = jnp.dot(wl_ref[i], h, preferred_element_type=jnp.float32) + bl_ref[i]
        h = ada_bn_act(h, abl_ref[i], gl_ref[i], bel_ref[i])

    # last conv (no norm / activation)
    out = jnp.dot(wlast_ref[...], h, preferred_element_type=jnp.float32) + blast_ref[...]
    out_ref[...] = out.astype(out_ref.dtype)


def _full_spec(shape):
    nd = len(shape)
    return pl.BlockSpec(shape, lambda i, nd=nd: (0,) * nd)


def adaptive_mapping_2d_to_3d(x, content, adabn_params, params):
    """x: (B, dim_template, N), content: (B, bottleneck), adabn_params: (B, P)."""
    B, Cin, N = x.shape
    BNECK = params["w1"].shape[0]
    H = params["w2"].shape[0]
    NL = params["wl"].shape[0]
    lanes = B * N
    f32 = jnp.float32

    def lanes_full(p):
        # (B, C) -> (C, B*N): batch folded into lanes, constant over points.
        C = p.shape[1]
        return jnp.broadcast_to(p.T[:, :, None], (C, B, N)).reshape(C, lanes)

    def ab_full(offset, C):
        a = adabn_params[:, offset:offset + C].astype(f32)
        b = adabn_params[:, offset + C:offset + 2 * C].astype(f32)
        return jnp.stack([lanes_full(a), lanes_full(b)], axis=0)      # (2, C, B*N)

    # fold batch into the lane axis: (B, Cin, N) -> (Cin, B*N)
    x2 = jnp.transpose(x, (1, 0, 2)).reshape(Cin, lanes).astype(f32)

    # latent vector + conv1 bias pre-added (host side), broadcast across points
    cb = lanes_full(content.astype(f32) + params["b1"][:, 0][None, :])

    # per-layer adaptive a/b pre-split & pre-broadcast on the host
    ab1 = ab_full(0, BNECK)
    ab2 = ab_full(2 * BNECK, H)
    abl = jnp.stack(
        [ab_full(2 * BNECK + 2 * H * (1 + i), H) for i in range(NL)], axis=0)

    args = (x2, cb, ab1, ab2, abl,
            params["w1"], params["w2"], params["b2"],
            params["wl"], params["bl"], params["wlast"], params["blast"],
            params["g1"], params["be1"], params["g2"], params["be2"],
            params["gl"], params["bel"])

    out_flat = pl.pallas_call(
        decoder_kernel,
        out_shape=jax.ShapeDtypeStruct((3, lanes), jnp.float32),
        grid=(1,),
        in_specs=[_full_spec(a.shape) for a in args],
        out_specs=_full_spec((3, lanes)),
        compiler_params=pltpu.CompilerParams(
            dimension_semantics=("arbitrary",)),
    )(*args)

    # (3, B*N) -> (B, 3, N)
    return jnp.transpose(out_flat.reshape(3, B, N), (1, 0, 2))


if __name__ == "__main__":
    # opt: bottleneck_size=32, dim_template=2, hidden_neurons=32, num_layers=2,
    #      activation='relu'
    B, N = 2, 128
    DIM_TEMPLATE, BNECK, H, L = 2, 32, 32, 2

    key = jax.random.PRNGKey(0)
    ks = jax.random.split(key, 12)

    x = jax.random.normal(ks[0], (B, DIM_TEMPLATE, N), jnp.float32)
    content = jax.random.normal(ks[1], (B, BNECK), jnp.float32)   # latent (B,C); broadcast over N
    P_total = 2 * BNECK + 2 * H + L * 2 * H                       # 256
    adabn_params = 0.5 * jax.random.normal(ks[2], (B, P_total), jnp.float32)

    params = dict(
        w1=0.1 * jax.random.normal(ks[3], (BNECK, DIM_TEMPLATE), jnp.float32),
        b1=0.1 * jax.random.normal(ks[4], (BNECK, 1), jnp.float32),
        w2=0.1 * jax.random.normal(ks[5], (H, BNECK), jnp.float32),
        b2=0.1 * jax.random.normal(ks[6], (H, 1), jnp.float32),
        wl=0.1 * jax.random.normal(ks[7], (L, H, H), jnp.float32),
        bl=0.1 * jax.random.normal(ks[8], (L, H, 1), jnp.float32),
        wlast=0.1 * jax.random.normal(ks[9], (3, H), jnp.float32),
        blast=0.1 * jax.random.normal(ks[10], (3, 1), jnp.float32),
        # BatchNorm1d affine params at PyTorch default init (identity affine)
        g1=jnp.ones((BNECK, 1), jnp.float32), be1=jnp.zeros((BNECK, 1), jnp.float32),
        g2=jnp.ones((H, 1), jnp.float32), be2=jnp.zeros((H, 1), jnp.float32),
        gl=jnp.ones((L, H, 1), jnp.float32), bel=jnp.zeros((L, H, 1), jnp.float32),
    )

    out = adaptive_mapping_2d_to_3d(x, content, adabn_params, params)
    jax.block_until_ready(out)
    assert out.shape == (B, 3, N) and out.dtype == jnp.float32
    assert bool(jnp.all(jnp.isfinite(out)))
    print("KERNEL_OK")
</pallas_src>

<mosaic_0001>
module attributes {stable_mosaic.version = 11 : i64} {
  func.func @decoder_kernel(%arg0: i32, %arg1: memref<2x256xf32, #tpu.memory_space<vmem>>, %arg2: memref<32x256xf32, #tpu.memory_space<vmem>>, %arg3: memref<2x32x256xf32, #tpu.memory_space<vmem>>, %arg4: memref<2x32x256xf32, #tpu.memory_space<vmem>>, %arg5: memref<2x2x32x256xf32, #tpu.memory_space<vmem>>, %arg6: memref<32x2xf32, #tpu.memory_space<vmem>>, %arg7: memref<32x32xf32, #tpu.memory_space<vmem>>, %arg8: memref<32x1xf32, #tpu.memory_space<vmem>>, %arg9: memref<2x32x32xf32, #tpu.memory_space<vmem>>, %arg10: memref<2x32x1xf32, #tpu.memory_space<vmem>>, %arg11: memref<3x32xf32, #tpu.memory_space<vmem>>, %arg12: memref<3x1xf32, #tpu.memory_space<vmem>>, %arg13: memref<32x1xf32, #tpu.memory_space<vmem>>, %arg14: memref<32x1xf32, #tpu.memory_space<vmem>>, %arg15: memref<32x1xf32, #tpu.memory_space<vmem>>, %arg16: memref<32x1xf32, #tpu.memory_space<vmem>>, %arg17: memref<2x32x1xf32, #tpu.memory_space<vmem>>, %arg18: memref<2x32x1xf32, #tpu.memory_space<vmem>>, %arg19: memref<3x256xf32, #tpu.memory_space<vmem>>) attributes {dimension_semantics = [#tpu.dimension_semantics<arbitrary>], iteration_bounds = array<i64: 1>, scalar_prefetch = 0 : i64, scratch_operands = 0 : i64, tpu.core_type = #tpu.core_type<tc>, window_params = [{pipeline_mode = #tpu.pipeline_mode<synchronous>, transform_indices = @transform_0, window_bounds = array<i64: 2, 256>}, {pipeline_mode = #tpu.pipeline_mode<synchronous>, transform_indices = @transform_1, window_bounds = array<i64: 32, 256>}, {pipeline_mode = #tpu.pipeline_mode<synchronous>, transform_indices = @transform_2, window_bounds = array<i64: 2, 32, 256>}, {pipeline_mode = #tpu.pipeline_mode<synchronous>, transform_indices = @transform_3, window_bounds = array<i64: 2, 32, 256>}, {pipeline_mode = #tpu.pipeline_mode<synchronous>, transform_indices = @transform_4, window_bounds = array<i64: 2, 2, 32, 256>}, {pipeline_mode = #tpu.pipeline_mode<synchronous>, transform_indices = @transform_5, window_bounds = array<i64: 32, 2>}, {pipeline_mode = #tpu.pipeline_mode<synchronous>, transform_indices = @transform_6, window_bounds = array<i64: 32, 32>}, {pipeline_mode = #tpu.pipeline_mode<synchronous>, transform_indices = @transform_7, window_bounds = array<i64: 32, 1>}, {pipeline_mode = #tpu.pipeline_mode<synchronous>, transform_indices = @transform_8, window_bounds = array<i64: 2, 32, 32>}, {pipeline_mode = #tpu.pipeline_mode<synchronous>, transform_indices = @transform_9, window_bounds = array<i64: 2, 32, 1>}, {pipeline_mode = #tpu.pipeline_mode<synchronous>, transform_indices = @transform_10, window_bounds = array<i64: 3, 32>}, {pipeline_mode = #tpu.pipeline_mode<synchronous>, transform_indices = @transform_11, window_bounds = array<i64: 3, 1>}, {pipeline_mode = #tpu.pipeline_mode<synchronous>, transform_indices = @transform_12, window_bounds = array<i64: 32, 1>}, {pipeline_mode = #tpu.pipeline_mode<synchronous>, transform_indices = @transform_13, window_bounds = array<i64: 32, 1>}, {pipeline_mode = #tpu.pipeline_mode<synchronous>, transform_indices = @transform_14, window_bounds = array<i64: 32, 1>}, {pipeline_mode = #tpu.pipeline_mode<synchronous>, transform_indices = @transform_15, window_bounds = array<i64: 32, 1>}, {pipeline_mode = #tpu.pipeline_mode<synchronous>, transform_indices = @transform_16, window_bounds = array<i64: 2, 32, 1>}, {pipeline_mode = #tpu.pipeline_mode<synchronous>, transform_indices = @transform_17, window_bounds = array<i64: 2, 32, 1>}, {pipeline_mode = #tpu.pipeline_mode<synchronous>, transform_indices = @transform_18, window_bounds = array<i64: 3, 256>}]} {
    %c0 = arith.constant 0 : index
    %c0_0 = arith.constant 0 : index
    %0 = vector.load %arg1[%c0, %c0_0] : memref<2x256xf32, #tpu.memory_space<vmem>>, vector<2x256xf32>
    %c0_1 = arith.constant 0 : index
    %c0_2 = arith.constant 0 : index
    %1 = vector.load %arg6[%c0_1, %c0_2] : memref<32x2xf32, #tpu.memory_space<vmem>>, vector<32x2xf32>
    %c0_3 = arith.constant 0 : index
    %c0_4 = arith.constant 0 : index
    %2 = vector.load %arg2[%c0_3, %c0_4] : memref<32x256xf32, #tpu.memory_space<vmem>>, vector<32x256xf32>
    %3 = vector.extract_strided_slice %1 {offsets = [0, 0], sizes = [32, 1], strides = [1, 1]} : vector<32x2xf32> to vector<32x1xf32>
    %4 = vector.extract_strided_slice %0 {offsets = [0, 0], sizes = [1, 256], strides = [1, 1]} : vector<2x256xf32> to vector<1x256xf32>
    %5 = vector.broadcast %3 : vector<32x1xf32> to vector<32x256xf32>
    %6 = vector.broadcast %4 : vector<1x256xf32> to vector<32x256xf32>
    %7 = arith.mulf %5, %6 : vector<32x256xf32>
    %8 = arith.addf %2, %7 : vector<32x256xf32>
    %9 = vector.extract_strided_slice %1 {offsets = [0, 1], sizes = [32, 1], strides = [1, 1]} : vector<32x2xf32> to vector<32x1xf32>
    %10 = vector.extract_strided_slice %0 {offsets = [1, 0], sizes = [1, 256], strides = [1, 1]} : vector<2x256xf32> to vector<1x256xf32>
    %11 = vector.broadcast %9 : vector<32x1xf32> to vector<32x256xf32>
    %12 = vector.broadcast %10 : vector<1x256xf32> to vector<32x256xf32>
    %13 = arith.mulf %11, %12 : vector<32x256xf32>
    %14 = arith.addf %8, %13 : vector<32x256xf32>
    %c0_5 = arith.constant 0 : index
    %c0_6 = arith.constant 0 : index
    %c0_7 = arith.constant 0 : index
    %15 = vector.load %arg3[%c0_5, %c0_6, %c0_7] : memref<2x32x256xf32, #tpu.memory_space<vmem>>, vector<2x32x256xf32>
    %c0_8 = arith.constant 0 : index
    %c0_9 = arith.constant 0 : index
    %16 = vector.load %arg13[%c0_8, %c0_9] : memref<32x1xf32, #tpu.memory_space<vmem>>, vector<32x1xf32>
    %c0_10 = arith.constant 0 : index
    %c0_11 = arith.constant 0 : index
    %17 = vector.load %arg14[%c0_10, %c0_11] : memref<32x1xf32, #tpu.memory_space<vmem>>, vector<32x1xf32>
    %cst = arith.constant dense<0.000000e+00> : vector<32xf32>
    %18 = vector.multi_reduction <add>, %14, %cst [1] : vector<32x256xf32> to vector<32xf32>
    %19 = vector.shape_cast %18 : vector<32xf32> to vector<32x1xf32>
    %20 = arith.mulf %14, %14 : vector<32x256xf32>
    %cst_12 = arith.constant dense<0.000000e+00> : vector<32xf32>
    %21 = vector.multi_reduction <add>, %20, %cst_12 [1] : vector<32x256xf32> to vector<32xf32>
    %22 = vector.shape_cast %21 : vector<32xf32> to vector<32x1xf32>
    %cst_13 = arith.constant 3.906250e-03 : f32
    %23 = vector.broadcast %cst_13 : f32 to vector<32x1xf32>
    %24 = arith.mulf %19, %23 : vector<32x1xf32>
    %cst_14 = arith.constant 3.906250e-03 : f32
    %25 = vector.broadcast %cst_14 : f32 to vector<32x1xf32>
    %26 = arith.mulf %22, %25 : vector<32x1xf32>
    %27 = arith.mulf %24, %24 : vector<32x1xf32>
    %28 = arith.subf %26, %27 : vector<32x1xf32>
    %cst_15 = arith.constant 9.99999974E-6 : f32
    %29 = vector.broadcast %cst_15 : f32 to vector<32x1xf32>
    %30 = arith.addf %28, %29 : vector<32x1xf32>
    %31 = math.rsqrt %30 : vector<32x1xf32>
    %32 = arith.mulf %16, %31 : vector<32x1xf32>
    %33 = arith.mulf %24, %32 : vector<32x1xf32>
    %34 = arith.subf %17, %33 : vector<32x1xf32>
    %35 = vector.extract_strided_slice %15 {offsets = [0, 0, 0], sizes = [1, 32, 256], strides = [1, 1, 1]} : vector<2x32x256xf32> to vector<1x32x256xf32>
    %36 = vector.shape_cast %35 : vector<1x32x256xf32> to vector<32x256xf32>
    %37 = vector.extract_strided_slice %15 {offsets = [1, 0, 0], sizes = [1, 32, 256], strides = [1, 1, 1]} : vector<2x32x256xf32> to vector<1x32x256xf32>
    %38 = vector.shape_cast %37 : vector<1x32x256xf32> to vector<32x256xf32>
    %39 = vector.broadcast %32 : vector<32x1xf32> to vector<32x256xf32>
    %40 = arith.mulf %38, %39 : vector<32x256xf32>
    %41 = arith.addf %36, %40 : vector<32x256xf32>
    %42 = arith.mulf %41, %14 : vector<32x256xf32>
    %43 = vector.broadcast %34 : vector<32x1xf32> to vector<32x256xf32>
    %44 = arith.mulf %38, %43 : vector<32x256xf32>
    %45 = arith.addf %42, %44 : vector<32x256xf32>
    %cst_16 = arith.constant 0.000000e+00 : f32
    %46 = vector.broadcast %cst_16 : f32 to vector<32x256xf32>
    %47 = arith.maximumf %45, %46 : vector<32x256xf32>
    %c0_17 = arith.constant 0 : index
    %c0_18 = arith.constant 0 : index
    %48 = vector.load %arg7[%c0_17, %c0_18] : memref<32x32xf32, #tpu.memory_space<vmem>>, vector<32x32xf32>
    %cst_19 = arith.constant dense<0.000000e+00> : vector<32x256xf32>
    %49 = tpu.matmul %48, %47, %cst_19 {dimension_numbers = #tpu.dot_dimension_numbers<[1], [0], [0], [1], [0, 0, 1, 1], [], []>} : vector<32x32xf32>, vector<32x256xf32>, vector<32x256xf32> -> vector<32x256xf32>
    %c0_20 = arith.constant 0 : index
    %c0_21 = arith.constant 0 : index
    %50 = vector.load %arg8[%c0_20, %c0_21] : memref<32x1xf32, #tpu.memory_space<vmem>>, vector<32x1xf32>
    %51 = vector.broadcast %50 : vector<32x1xf32> to vector<32x256xf32>
    %52 = arith.addf %49, %51 : vector<32x256xf32>
    %c0_22 = arith.constant 0 : index
    %c0_23 = arith.constant 0 : index
    %c0_24 = arith.constant 0 : index
    %53 = vector.load %arg4[%c0_22, %c0_23, %c0_24] : memref<2x32x256xf32, #tpu.memory_space<vmem>>, vector<2x32x256xf32>
    %c0_25 = arith.constant 0 : index
    %c0_26 = arith.constant 0 : index
    %54 = vector.load %arg15[%c0_25, %c0_26] : memref<32x1xf32, #tpu.memory_space<vmem>>, vector<32x1xf32>
    %c0_27 = arith.constant 0 : index
    %c0_28 = arith.constant 0 : index
    %55 = vector.load %arg16[%c0_27, %c0_28] : memref<32x1xf32, #tpu.memory_space<vmem>>, vector<32x1xf32>
    %cst_29 = arith.constant dense<0.000000e+00> : vector<32xf32>
    %56 = vector.multi_reduction <add>, %52, %cst_29 [1] : vector<32x256xf32> to vector<32xf32>
    %57 = vector.shape_cast %56 : vector<32xf32> to vector<32x1xf32>
    %58 = arith.mulf %52, %52 : vector<32x256xf32>
    %cst_30 = arith.constant dense<0.000000e+00> : vector<32xf32>
    %59 = vector.multi_reduction <add>, %58, %cst_30 [1] : vector<32x256xf32> to vector<32xf32>
    %60 = vector.shape_cast %59 : vector<32xf32> to vector<32x1xf32>
    %cst_31 = arith.constant 3.906250e-03 : f32
    %61 = vector.broadcast %cst_31 : f32 to vector<32x1xf32>
    %62 = arith.mulf %57, %61 : vector<32x1xf32>
    %cst_32 = arith.constant 3.906250e-03 : f32
    %63 = vector.broadcast %cst_32 : f32 to vector<32x1xf32>
    %64 = arith.mulf %60, %63 : vector<32x1xf32>
    %65 = arith.mulf %62, %62 : vector<32x1xf32>
    %66 = arith.subf %64, %65 : vector<32x1xf32>
    %cst_33 = arith.constant 9.99999974E-6 : f32
    %67 = vector.broadcast %cst_33 : f32 to vector<32x1xf32>
    %68 = arith.addf %66, %67 : vector<32x1xf32>
    %69 = math.rsqrt %68 : vector<32x1xf32>
    %70 = arith.mulf %54, %69 : vector<32x1xf32>
    %71 = arith.mulf %62, %70 : vector<32x1xf32>
    %72 = arith.subf %55, %71 : vector<32x1xf32>
    %73 = vector.extract_strided_slice %53 {offsets = [0, 0, 0], sizes = [1, 32, 256], strides = [1, 1, 1]} : vector<2x32x256xf32> to vector<1x32x256xf32>
    %74 = vector.shape_cast %73 : vector<1x32x256xf32> to vector<32x256xf32>
    %75 = vector.extract_strided_slice %53 {offsets = [1, 0, 0], sizes = [1, 32, 256], strides = [1, 1, 1]} : vector<2x32x256xf32> to vector<1x32x256xf32>
    %76 = vector.shape_cast %75 : vector<1x32x256xf32> to vector<32x256xf32>
    %77 = vector.broadcast %70 : vector<32x1xf32> to vector<32x256xf32>
    %78 = arith.mulf %76, %77 : vector<32x256xf32>
    %79 = arith.addf %74, %78 : vector<32x256xf32>
    %80 = arith.mulf %79, %52 : vector<32x256xf32>
    %81 = vector.broadcast %72 : vector<32x1xf32> to vector<32x256xf32>
    %82 = arith.mulf %76, %81 : vector<32x256xf32>
    %83 = arith.addf %80, %82 : vector<32x256xf32>
    %cst_34 = arith.constant 0.000000e+00 : f32
    %84 = vector.broadcast %cst_34 : f32 to vector<32x256xf32>
    %85 = arith.maximumf %83, %84 : vector<32x256xf32>
    %c0_35 = arith.constant 0 : index
    %c0_36 = arith.constant 0 : index
    %c0_37 = arith.constant 0 : index
    %86 = vector.load %arg9[%c0_35, %c0_36, %c0_37] : memref<2x32x32xf32, #tpu.memory_space<vmem>>, vector<1x32x32xf32>
    %87 = vector.shape_cast %86 : vector<1x32x32xf32> to vector<32x32xf32>
    %cst_38 = arith.constant dense<0.000000e+00> : vector<32x256xf32>
    %88 = tpu.matmul %87, %85, %cst_38 {dimension_numbers = #tpu.dot_dimension_numbers<[1], [0], [0], [1], [0, 0, 1, 1], [], []>} : vector<32x32xf32>, vector<32x256xf32>, vector<32x256xf32> -> vector<32x256xf32>
    %c0_39 = arith.constant 0 : index
    %c0_40 = arith.constant 0 : index
    %c0_41 = arith.constant 0 : index
    %89 = vector.load %arg10[%c0_39, %c0_40, %c0_41] : memref<2x32x1xf32, #tpu.memory_space<vmem>>, vector<1x32x1xf32>
    %90 = vector.shape_cast %89 : vector<1x32x1xf32> to vector<32x1xf32>
    %91 = vector.broadcast %90 : vector<32x1xf32> to vector<32x256xf32>
    %92 = arith.addf %88, %91 : vector<32x256xf32>
    %c0_42 = arith.constant 0 : index
    %c0_43 = arith.constant 0 : index
    %c0_44 = arith.constant 0 : index
    %c0_45 = arith.constant 0 : index
    %93 = vector.load %arg5[%c0_42, %c0_43, %c0_44, %c0_45] : memref<2x2x32x256xf32, #tpu.memory_space<vmem>>, vector<1x2x32x256xf32>
    %94 = vector.shape_cast %93 : vector<1x2x32x256xf32> to vector<2x32x256xf32>
    %c0_46 = arith.constant 0 : index
    %c0_47 = arith.constant 0 : index
    %c0_48 = arith.constant 0 : index
    %95 = vector.load %arg17[%c0_46, %c0_47, %c0_48] : memref<2x32x1xf32, #tpu.memory_space<vmem>>, vector<1x32x1xf32>
    %96 = vector.shape_cast %95 : vector<1x32x1xf32> to vector<32x1xf32>
    %c0_49 = arith.constant 0 : index
    %c0_50 = arith.constant 0 : index
    %c0_51 = arith.constant 0 : index
    %97 = vector.load %arg18[%c0_49, %c0_50, %c0_51] : memref<2x32x1xf32, #tpu.memory_space<vmem>>, vector<1x32x1xf32>
    %98 = vector.shape_cast %97 : vector<1x32x1xf32> to vector<32x1xf32>
    %cst_52 = arith.constant dense<0.000000e+00> : vector<32xf32>
    %99 = vector.multi_reduction <add>, %92, %cst_52 [1] : vector<32x256xf32> to vector<32xf32>
    %100 = vector.shape_cast %99 : vector<32xf32> to vector<32x1xf32>
    %101 = arith.mulf %92, %92 : vector<32x256xf32>
    %cst_53 = arith.constant dense<0.000000e+00> : vector<32xf32>
    %102 = vector.multi_reduction <add>, %101, %cst_53 [1] : vector<32x256xf32> to vector<32xf32>
    %103 = vector.shape_cast %102 : vector<32xf32> to vector<32x1xf32>
    %cst_54 = arith.constant 3.906250e-03 : f32
    %104 = vector.broadcast %cst_54 : f32 to vector<32x1xf32>
    %105 = arith.mulf %100, %104 : vector<32x1xf32>
    %cst_55 = arith.constant 3.906250e-03 : f32
    %106 = vector.broadcast %cst_55 : f32 to vector<32x1xf32>
    %107 = arith.mulf %103, %106 : vector<32x1xf32>
    %108 = arith.mulf %105, %105 : vector<32x1xf32>
    %109 = arith.subf %107, %108 : vector<32x1xf32>
    %cst_56 = arith.constant 9.99999974E-6 : f32
    %110 = vector.broadcast %cst_56 : f32 to vector<32x1xf32>
    %111 = arith.addf %109, %110 : vector<32x1xf32>
    %112 = math.rsqrt %111 : vector<32x1xf32>
    %113 = arith.mulf %96, %112 : vector<32x1xf32>
    %114 = arith.mulf %105, %113 : vector<32x1xf32>
    %115 = arith.subf %98, %114 : vector<32x1xf32>
    %116 = vector.extract_strided_slice %94 {offsets = [0, 0, 0], sizes = [1, 32, 256], strides = [1, 1, 1]} : vector<2x32x256xf32> to vector<1x32x256xf32>
    %117 = vector.shape_cast %116 : vector<1x32x256xf32> to vector<32x256xf32>
    %118 = vector.extract_strided_slice %94 {offsets = [1, 0, 0], sizes = [1, 32, 256], strides = [1, 1, 1]} : vector<2x32x256xf32> to vector<1x32x256xf32>
    %119 = vector.shape_cast %118 : vector<1x32x256xf32> to vector<32x256xf32>
    %120 = vector.broadcast %113 : vector<32x1xf32> to vector<32x256xf32>
    %121 = arith.mulf %119, %120 : vector<32x256xf32>
    %122 = arith.addf %117, %121 : vector<32x256xf32>
    %123 = arith.mulf %122, %92 : vector<32x256xf32>
    %124 = vector.broadcast %115 : vector<32x1xf32> to vector<32x256xf32>
    %125 = arith.mulf %119, %124 : vector<32x256xf32>
    %126 = arith.addf %123, %125 : vector<32x256xf32>
    %cst_57 = arith.constant 0.000000e+00 : f32
    %127 = vector.broadcast %cst_57 : f32 to vector<32x256xf32>
    %128 = arith.maximumf %126, %127 : vector<32x256xf32>
    %c1 = arith.constant 1 : index
    %c0_58 = arith.constant 0 : index
    %c0_59 = arith.constant 0 : index
    %129 = vector.load %arg9[%c1, %c0_58, %c0_59] : memref<2x32x32xf32, #tpu.memory_space<vmem>>, vector<1x32x32xf32>
    %130 = vector.shape_cast %129 : vector<1x32x32xf32> to vector<32x32xf32>
    %cst_60 = arith.constant dense<0.000000e+00> : vector<32x256xf32>
    %131 = tpu.matmul %130, %128, %cst_60 {dimension_numbers = #tpu.dot_dimension_numbers<[1], [0], [0], [1], [0, 0, 1, 1], [], []>} : vector<32x32xf32>, vector<32x256xf32>, vector<32x256xf32> -> vector<32x256xf32>
    %c1_61 = arith.constant 1 : index
    %c0_62 = arith.constant 0 : index
    %c0_63 = arith.constant 0 : index
    %132 = vector.load %arg10[%c1_61, %c0_62, %c0_63] : memref<2x32x1xf32, #tpu.memory_space<vmem>>, vector<1x32x1xf32>
    %133 = vector.shape_cast %132 : vector<1x32x1xf32> to vector<32x1xf32>
    %134 = vector.broadcast %133 : vector<32x1xf32> to vector<32x256xf32>
    %135 = arith.addf %131, %134 : vector<32x256xf32>
    %c1_64 = arith.constant 1 : index
    %c0_65 = arith.constant 0 : index
    %c0_66 = arith.constant 0 : index
    %c0_67 = arith.constant 0 : index
    %136 = vector.load %arg5[%c1_64, %c0_65, %c0_66, %c0_67] : memref<2x2x32x256xf32, #tpu.memory_space<vmem>>, vector<1x2x32x256xf32>
    %137 = vector.shape_cast %136 : vector<1x2x32x256xf32> to vector<2x32x256xf32>
    %c1_68 = arith.constant 1 : index
    %c0_69 = arith.constant 0 : index
    %c0_70 = arith.constant 0 : index
    %138 = vector.load %arg17[%c1_68, %c0_69, %c0_70] : memref<2x32x1xf32, #tpu.memory_space<vmem>>, vector<1x32x1xf32>
    %139 = vector.shape_cast %138 : vector<1x32x1xf32> to vector<32x1xf32>
    %c1_71 = arith.constant 1 : index
    %c0_72 = arith.constant 0 : index
    %c0_73 = arith.constant 0 : index
    %140 = vector.load %arg18[%c1_71, %c0_72, %c0_73] : memref<2x32x1xf32, #tpu.memory_space<vmem>>, vector<1x32x1xf32>
    %141 = vector.shape_cast %140 : vector<1x32x1xf32> to vector<32x1xf32>
    %cst_74 = arith.constant dense<0.000000e+00> : vector<32xf32>
    %142 = vector.multi_reduction <add>, %135, %cst_74 [1] : vector<32x256xf32> to vector<32xf32>
    %143 = vector.shape_cast %142 : vector<32xf32> to vector<32x1xf32>
    %144 = arith.mulf %135, %135 : vector<32x256xf32>
    %cst_75 = arith.constant dense<0.000000e+00> : vector<32xf32>
    %145 = vector.multi_reduction <add>, %144, %cst_75 [1] : vector<32x256xf32> to vector<32xf32>
    %146 = vector.shape_cast %145 : vector<32xf32> to vector<32x1xf32>
    %cst_76 = arith.constant 3.906250e-03 : f32
    %147 = vector.broadcast %cst_76 : f32 to vector<32x1xf32>
    %148 = arith.mulf %143, %147 : vector<32x1xf32>
    %cst_77 = arith.constant 3.906250e-03 : f32
    %149 = vector.broadcast %cst_77 : f32 to vector<32x1xf32>
    %150 = arith.mulf %146, %149 : vector<32x1xf32>
    %151 = arith.mulf %148, %148 : vector<32x1xf32>
    %152 = arith.subf %150, %151 : vector<32x1xf32>
    %cst_78 = arith.constant 9.99999974E-6 : f32
    %153 = vector.broadcast %cst_78 : f32 to vector<32x1xf32>
    %154 = arith.addf %152, %153 : vector<32x1xf32>
    %155 = math.rsqrt %154 : vector<32x1xf32>
    %156 = arith.mulf %139, %155 : vector<32x1xf32>
    %157 = arith.mulf %148, %156 : vector<32x1xf32>
    %158 = arith.subf %141, %157 : vector<32x1xf32>
    %159 = vector.extract_strided_slice %137 {offsets = [0, 0, 0], sizes = [1, 32, 256], strides = [1, 1, 1]} : vector<2x32x256xf32> to vector<1x32x256xf32>
    %160 = vector.shape_cast %159 : vector<1x32x256xf32> to vector<32x256xf32>
    %161 = vector.extract_strided_slice %137 {offsets = [1, 0, 0], sizes = [1, 32, 256], strides = [1, 1, 1]} : vector<2x32x256xf32> to vector<1x32x256xf32>
    %162 = vector.shape_cast %161 : vector<1x32x256xf32> to vector<32x256xf32>
    %163 = vector.broadcast %156 : vector<32x1xf32> to vector<32x256xf32>
    %164 = arith.mulf %162, %163 : vector<32x256xf32>
    %165 = arith.addf %160, %164 : vector<32x256xf32>
    %166 = arith.mulf %165, %135 : vector<32x256xf32>
    %167 = vector.broadcast %158 : vector<32x1xf32> to vector<32x256xf32>
    %168 = arith.mulf %162, %167 : vector<32x256xf32>
    %169 = arith.addf %166, %168 : vector<32x256xf32>
    %cst_79 = arith.constant 0.000000e+00 : f32
    %170 = vector.broadcast %cst_79 : f32 to vector<32x256xf32>
    %171 = arith.maximumf %169, %170 : vector<32x256xf32>
    %c0_80 = arith.constant 0 : index
    %c0_81 = arith.constant 0 : index
    %172 = vector.load %arg11[%c0_80, %c0_81] : memref<3x32xf32, #tpu.memory_space<vmem>>, vector<3x32xf32>
    %cst_82 = arith.constant dense<0.000000e+00> : vector<3x256xf32>
    %173 = tpu.matmul %172, %171, %cst_82 {dimension_numbers = #tpu.dot_dimension_numbers<[1], [0], [0], [1], [0, 0, 1, 1], [], []>} : vector<3x32xf32>, vector<32x256xf32>, vector<3x256xf32> -> vector<3x256xf32>
    %c0_83 = arith.constant 0 : index
    %c0_84 = arith.constant 0 : index
    %174 = vector.load %arg12[%c0_83, %c0_84] : memref<3x1xf32, #tpu.memory_space<vmem>>, vector<3x1xf32>
    %175 = vector.broadcast %174 : vector<3x1xf32> to vector<3x256xf32>
    %176 = arith.addf %173, %175 : vector<3x256xf32>
    %c0_85 = arith.constant 0 : index
    %c0_86 = arith.constant 0 : index
    %177 = vector.load %arg19[%c0_85, %c0_86] : memref<3x256xf32, #tpu.memory_space<vmem>>, vector<3x256xf32>
    tpu.vector_store %arg19[%c0_85, %c0_86], %176 {strides = array<i32>} : memref<3x256xf32, #tpu.memory_space<vmem>>, vector<3x256xf32>,
    return
  }
  func.func @transform_0(%arg0: i32) -> (i32, i32) {
    %c0_i32 = arith.constant 0 : i32
    %c0_i32_0 = arith.constant 0 : i32
    %c0_i32_1 = arith.constant 0 : i32
    return %c0_i32, %c0_i32_0 : i32, i32
  }
  func.func @transform_1(%arg0: i32) -> (i32, i32) {
    %c0_i32 = arith.constant 0 : i32
    %c0_i32_0 = arith.constant 0 : i32
    %c0_i32_1 = arith.constant 0 : i32
    return %c0_i32, %c0_i32_0 : i32, i32
  }
  func.func @transform_2(%arg0: i32) -> (i32, i32, i32) {
    %c0_i32 = arith.constant 0 : i32
    %c0_i32_0 = arith.constant 0 : i32
    %c0_i32_1 = arith.constant 0 : i32
    %c0_i32_2 = arith.constant 0 : i32
    return %c0_i32, %c0_i32_0, %c0_i32_1 : i32, i32, i32
  }
  func.func @transform_3(%arg0: i32) -> (i32, i32, i32) {
    %c0_i32 = arith.constant 0 : i32
    %c0_i32_0 = arith.constant 0 : i32
    %c0_i32_1 = arith.constant 0 : i32
    %c0_i32_2 = arith.constant 0 : i32
    return %c0_i32, %c0_i32_0, %c0_i32_1 : i32, i32, i32
  }
  func.func @transform_4(%arg0: i32) -> (i32, i32, i32, i32) {
    %c0_i32 = arith.constant 0 : i32
    %c0_i32_0 = arith.constant 0 : i32
    %c0_i32_1 = arith.constant 0 : i32
    %c0_i32_2 = arith.constant 0 : i32
    %c0_i32_3 = arith.constant 0 : i32
    return %c0_i32, %c0_i32_0, %c0_i32_1, %c0_i32_2 : i32, i32, i32, i32
  }
  func.func @transform_5(%arg0: i32) -> (i32, i32) {
    %c0_i32 = arith.constant 0 : i32
    %c0_i32_0 = arith.constant 0 : i32
    %c0_i32_1 = arith.constant 0 : i32
    return %c0_i32, %c0_i32_0 : i32, i32
  }
  func.func @transform_6(%arg0: i32) -> (i32, i32) {
    %c0_i32 = arith.constant 0 : i32
    %c0_i32_0 = arith.constant 0 : i32
    %c0_i32_1 = arith.constant 0 : i32
    return %c0_i32, %c0_i32_0 : i32, i32
  }
  func.func @transform_7(%arg0: i32) -> (i32, i32) {
    %c0_i32 = arith.constant 0 : i32
    %c0_i32_0 = arith.constant 0 : i32
    %c0_i32_1 = arith.constant 0 : i32
    return %c0_i32, %c0_i32_0 : i32, i32
  }
  func.func @transform_8(%arg0: i32) -> (i32, i32, i32) {
    %c0_i32 = arith.constant 0 : i32
    %c0_i32_0 = arith.constant 0 : i32
    %c0_i32_1 = arith.constant 0 : i32
    %c0_i32_2 = arith.constant 0 : i32
    return %c0_i32, %c0_i32_0, %c0_i32_1 : i32, i32, i32
  }
  func.func @transform_9(%arg0: i32) -> (i32, i32, i32) {
    %c0_i32 = arith.constant 0 : i32
    %c0_i32_0 = arith.constant 0 : i32
    %c0_i32_1 = arith.constant 0 : i32
    %c0_i32_2 = arith.constant 0 : i32
    return %c0_i32, %c0_i32_0, %c0_i32_1 : i32, i32, i32
  }
  func.func @transform_10(%arg0: i32) -> (i32, i32) {
    %c0_i32 = arith.constant 0 : i32
    %c0_i32_0 = arith.constant 0 : i32
    %c0_i32_1 = arith.constant 0 : i32
    return %c0_i32, %c0_i32_0 : i32, i32
  }
  func.func @transform_11(%arg0: i32) -> (i32, i32) {
    %c0_i32 = arith.constant 0 : i32
    %c0_i32_0 = arith.constant 0 : i32
    %c0_i32_1 = arith.constant 0 : i32
    return %c0_i32, %c0_i32_0 : i32, i32
  }
  func.func @transform_12(%arg0: i32) -> (i32, i32) {
    %c0_i32 = arith.constant 0 : i32
    %c0_i32_0 = arith.constant 0 : i32
    %c0_i32_1 = arith.constant 0 : i32
    return %c0_i32, %c0_i32_0 : i32, i32
  }
  func.func @transform_13(%arg0: i32) -> (i32, i32) {
    %c0_i32 = arith.constant 0 : i32
    %c0_i32_0 = arith.constant 0 : i32
    %c0_i32_1 = arith.constant 0 : i32
    return %c0_i32, %c0_i32_0 : i32, i32
  }
  func.func @transform_14(%arg0: i32) -> (i32, i32) {
    %c0_i32 = arith.constant 0 : i32
    %c0_i32_0 = arith.constant 0 : i32
    %c0_i32_1 = arith.constant 0 : i32
    return %c0_i32, %c0_i32_0 : i32, i32
  }
  func.func @transform_15(%arg0: i32) -> (i32, i32) {
    %c0_i32 = arith.constant 0 : i32
    %c0_i32_0 = arith.constant 0 : i32
    %c0_i32_1 = arith.constant 0 : i32
    return %c0_i32, %c0_i32_0 : i32, i32
  }
  func.func @transform_16(%arg0: i32) -> (i32, i32, i32) {
    %c0_i32 = arith.constant 0 : i32
    %c0_i32_0 = arith.constant 0 : i32
    %c0_i32_1 = arith.constant 0 : i32
    %c0_i32_2 = arith.constant 0 : i32
    return %c0_i32, %c0_i32_0, %c0_i32_1 : i32, i32, i32
  }
  func.func @transform_17(%arg0: i32) -> (i32, i32, i32) {
    %c0_i32 = arith.constant 0 : i32
    %c0_i32_0 = arith.constant 0 : i32
    %c0_i32_1 = arith.constant 0 : i32
    %c0_i32_2 = arith.constant 0 : i32
    return %c0_i32, %c0_i32_0, %c0_i32_1 : i32, i32, i32
  }
  func.func @transform_18(%arg0: i32) -> (i32, i32) {
    %c0_i32 = arith.constant 0 : i32
    %c0_i32_0 = arith.constant 0 : i32
    %c0_i32_1 = arith.constant 0 : i32
    return %c0_i32, %c0_i32_0 : i32, i32
  }
}

</mosaic_0001>

<llo_original>
// kernel: tpu_custom_call.1
$region0: #{tpu_custom_call.1}
  #allocation0 [shape = 'u32[]', space=smem, size = 0x4, offset = 0x4, fixed_abs, tag = 'smem constant byte address 0x4 - core index']
  #allocation1 [shape = 'u32[72,128]{1,0:T(1,128)}', space=vmem, size = 0x9000, scoped, tag = 'internal scratch']
  %s0 = inlined_call_operand.vmem [shape: f32[2,256], index: 0, kind: input, shape index: {}]
  %s1 = inlined_call_operand.vmem [shape: f32[32,256], index: 1, kind: input, shape index: {}]
  %s2 = inlined_call_operand.vmem [shape: f32[2,32,256], index: 2, kind: input, shape index: {}]
  %s3 = inlined_call_operand.hbm [shape: f32[2,32,256], index: 3, kind: input, shape index: {}]
  %s4 = inlined_call_operand.hbm [shape: f32[2,2,32,256], index: 4, kind: input, shape index: {}]
  %s5 = inlined_call_operand.vmem [shape: f32[32,2], index: 5, kind: input, shape index: {}]
  %s6 = inlined_call_operand.vmem [shape: f32[32,32], index: 6, kind: input, shape index: {}]
  %s7 = inlined_call_operand.vmem [shape: f32[32,1], index: 7, kind: input, shape index: {}]
  %s8 = inlined_call_operand.vmem [shape: f32[2,32,32], index: 8, kind: input, shape index: {}]
  %s9 = inlined_call_operand.vmem [shape: f32[2,32,1], index: 9, kind: input, shape index: {}]
  %s10 = inlined_call_operand.vmem [shape: f32[3,32], index: 10, kind: input, shape index: {}]
  %s11 = inlined_call_operand.vmem [shape: f32[3,1], index: 11, kind: input, shape index: {}]
  %s12 = inlined_call_operand.vmem [shape: f32[32,1], index: 12, kind: input, shape index: {}]
  %s13 = inlined_call_operand.vmem [shape: f32[32,1], index: 13, kind: input, shape index: {}]
  %s14 = inlined_call_operand.vmem [shape: f32[32,1], index: 14, kind: input, shape index: {}]
  %s15 = inlined_call_operand.vmem [shape: f32[32,1], index: 15, kind: input, shape index: {}]
  %s16 = inlined_call_operand.vmem [shape: f32[2,32,1], index: 16, kind: input, shape index: {}]
  %s17 = inlined_call_operand.vmem [shape: f32[2,32,1], index: 17, kind: input, shape index: {}]
  %s18 = inlined_call_operand.hbm [shape: f32[3,256], index: 18, kind: output, shape index: {}]
  %s19 = sld [smem:[#allocation0]]
  $region90: #{tpu_custom_call.1} parent=0
    _
  %s21 = ssub.s32 1, %s19
  %s22 = scalar_select 0, %s21, %s19
  $region1: #{tpu_custom_call.1} parent=0
    #allocation2 [shape = 'u8[65536]{0}', space=vmem, size = 0x10000, scoped, tag = 'input window, operand 3, single buffered']
    #allocation3 [shape = 's32[1]{0}', space=sflag, size = 0x4, scoped, tag = 'scoped memory for tpu_custom_call.1']
    #allocation4 [shape = 's32[1]{0}', space=sflag, size = 0x4, scoped, tag = 'scoped memory for tpu_custom_call.1']
    #allocation5 [shape = 'u8[131072]{0}', space=vmem, size = 0x20000, scoped, tag = 'input window, operand 4, single buffered']
    #allocation6 [shape = 's32[1]{0}', space=sflag, size = 0x4, scoped, tag = 'scoped memory for tpu_custom_call.1']
    #allocation7 [shape = 'u8[4096]{0}', space=vmem, size = 0x1000, scoped, tag = 'output window, operand 0, single buffered']
    %23 = vsyncpa [#allocation3], 0
    %24 = vsyncpa [#allocation6], 0
    %25 = vsyncpa [#allocation4], 0
    // Predicated region
    $region2: #{tpu_custom_call.1} parent=1 // pred_check
      _
    $region3: #{tpu_custom_call.1} parent=1 // pred_check_branch
      %27 = sbr.rel (0) target = $region5
    $region4: #{tpu_custom_call.1} parent=1 // pred_region
      _
    $region5: #{tpu_custom_call.1} parent=1 // pred_fallthru
      _
    // Predicated region
    $region6: #{tpu_custom_call.1} parent=1 // pred_check
      _
    $region7: #{tpu_custom_call.1} parent=1 // pred_check_branch
      %29 = sbr.rel (0) target = $region9
    $region8: #{tpu_custom_call.1} parent=1 // pred_region
      _
    $region9: #{tpu_custom_call.1} parent=1 // pred_fallthru
      _
    // Predicated region
    $region10: #{tpu_custom_call.1} parent=1 // pred_check
      _
    $region11: #{tpu_custom_call.1} parent=1 // pred_check_branch
      %31 = sbr.rel (0) target = $region13
    $region12: #{tpu_custom_call.1} parent=1 // pred_region
      _
    $region13: #{tpu_custom_call.1} parent=1 // pred_fallthru
      _
    // Predicated region
    $region14: #{tpu_custom_call.1} parent=1 // pred_check
      _
    $region15: #{tpu_custom_call.1} parent=1 // pred_check_branch
      %33 = sbr.rel (0) target = $region17
    $region16: #{tpu_custom_call.1} parent=1 // pred_region
      %35 = vsyncadd [#allocation3], 0
      %s36 = sshll.u32 %s3, 4
      %s37 = int_to_ptr.hbm [resolvable:$true] %s36
      %s38 = sshll.u32 [#allocation2], 4
      %s39 = int_to_ptr.vmem [resolvable:$true] %s38
      %44 = dma.hbm_to_vmem [thread:$0]  %s37, 2048, %s39, [#allocation3], 256, 256, 16
    $region17: #{tpu_custom_call.1} parent=1 // pred_fallthru
      _
    // Predicated region
    $region18: #{tpu_custom_call.1} parent=1 // pred_check
      _
    $region19: #{tpu_custom_call.1} parent=1 // pred_check_branch
      %46 = sbr.rel (0) target = $region21
    $region20: #{tpu_custom_call.1} parent=1 // pred_region
      %48 = vsyncadd [#allocation6], 0
      %s49 = sshll.u32 %s4, 4
      %s50 = int_to_ptr.hbm [resolvable:$true] %s49
      %s51 = sshll.u32 [#allocation5], 4
      %s52 = int_to_ptr.vmem [resolvable:$true] %s51
      %57 = dma.hbm_to_vmem [thread:$0]  %s50, 4096, %s52, [#allocation6], 256, 256, 16
    $region21: #{tpu_custom_call.1} parent=1 // pred_fallthru
      _
    // Predicated region
    $region22: #{tpu_custom_call.1} parent=1 // pred_check
      _
    $region23: #{tpu_custom_call.1} parent=1 // pred_check_branch
      %59 = sbr.rel (0) target = $region25
    $region24: #{tpu_custom_call.1} parent=1 // pred_region
      _
    $region25: #{tpu_custom_call.1} parent=1 // pred_fallthru
      _
    // Predicated region
    $region26: #{tpu_custom_call.1} parent=1 // pred_check
      _
    $region27: #{tpu_custom_call.1} parent=1 // pred_check_branch
      %61 = sbr.rel (0) target = $region29
    $region28: #{tpu_custom_call.1} parent=1 // pred_region
      _
    $region29: #{tpu_custom_call.1} parent=1 // pred_fallthru
      _
    // Predicated region
    $region30: #{tpu_custom_call.1} parent=1 // pred_check
      _
    $region31: #{tpu_custom_call.1} parent=1 // pred_check_branch
      %63 = sbr.rel (0) target = $region33
    $region32: #{tpu_custom_call.1} parent=1 // pred_region
      _
    $region33: #{tpu_custom_call.1} parent=1 // pred_fallthru
      _
    // Predicated region
    $region34: #{tpu_custom_call.1} parent=1 // pred_check
      _
    $region35: #{tpu_custom_call.1} parent=1 // pred_check_branch
      %65 = sbr.rel (0) target = $region37
    $region36: #{tpu_custom_call.1} parent=1 // pred_region
      _
    $region37: #{tpu_custom_call.1} parent=1 // pred_fallthru
      _
    // Predicated region
    $region38: #{tpu_custom_call.1} parent=1 // pred_check
      _
    $region39: #{tpu_custom_call.1} parent=1 // pred_check_branch
      %67 = sbr.rel (0) target = $region41
    $region40: #{tpu_custom_call.1} parent=1 // pred_region
      _
    $region41: #{tpu_custom_call.1} parent=1 // pred_fallthru
      _
    // Predicated region
    $region42: #{tpu_custom_call.1} parent=1 // pred_check
      _
    $region43: #{tpu_custom_call.1} parent=1 // pred_check_branch
      %69 = sbr.rel (0) target = $region45
    $region44: #{tpu_custom_call.1} parent=1 // pred_region
      _
    $region45: #{tpu_custom_call.1} parent=1 // pred_fallthru
      _
    // Predicated region
    $region46: #{tpu_custom_call.1} parent=1 // pred_check
      _
    $region47: #{tpu_custom_call.1} parent=1 // pred_check_branch
      %71 = sbr.rel (0) target = $region49
    $region48: #{tpu_custom_call.1} parent=1 // pred_region
      _
    $region49: #{tpu_custom_call.1} parent=1 // pred_fallthru
      _
    // Predicated region
    $region50: #{tpu_custom_call.1} parent=1 // pred_check
      _
    $region51: #{tpu_custom_call.1} parent=1 // pred_check_branch
      %73 = sbr.rel (0) target = $region53
    $region52: #{tpu_custom_call.1} parent=1 // pred_region
      _
    $region53: #{tpu_custom_call.1} parent=1 // pred_fallthru
      _
    // Predicated region
    $region54: #{tpu_custom_call.1} parent=1 // pred_check
      _
    $region55: #{tpu_custom_call.1} parent=1 // pred_check_branch
      %75 = sbr.rel (0) target = $region57
    $region56: #{tpu_custom_call.1} parent=1 // pred_region
      _
    $region57: #{tpu_custom_call.1} parent=1 // pred_fallthru
      _
    // Predicated region
    $region58: #{tpu_custom_call.1} parent=1 // pred_check
      _
    $region59: #{tpu_custom_call.1} parent=1 // pred_check_branch
      %77 = sbr.rel (0) target = $region61
    $region60: #{tpu_custom_call.1} parent=1 // pred_region
      _
    $region61: #{tpu_custom_call.1} parent=1 // pred_fallthru
      _
    // Predicated region
    $region62: #{tpu_custom_call.1} parent=1 // pred_check
      _
    $region63: #{tpu_custom_call.1} parent=1 // pred_check_branch
      %79 = sbr.rel (0) target = $region65
    $region64: #{tpu_custom_call.1} parent=1 // pred_region
      _
    $region65: #{tpu_custom_call.1} parent=1 // pred_fallthru
      _
    // Predicated region
    $region66: #{tpu_custom_call.1} parent=1 // pred_check
      _
    $region67: #{tpu_custom_call.1} parent=1 // pred_check_branch
      %81 = sbr.rel (0) target = $region69
    $region68: #{tpu_custom_call.1} parent=1 // pred_region
      _
    $region69: #{tpu_custom_call.1} parent=1 // pred_fallthru
      _
    // Predicated region
    $region70: #{tpu_custom_call.1} parent=1 // pred_check
      _
    $region71: #{tpu_custom_call.1} parent=1 // pred_check_branch
      %83 = sbr.rel (0) target = $region73
    $region72: #{tpu_custom_call.1} parent=1 // pred_region
      _
    $region73: #{tpu_custom_call.1} parent=1 // pred_fallthru
      _
    // Predicated region
    $region74: #{tpu_custom_call.1} parent=1 // pred_check
      _
    $region75: #{tpu_custom_call.1} parent=1 // pred_check_branch
      %85 = sbr.rel (0) target = $region77
    $region76: #{tpu_custom_call.1} parent=1 // pred_region
      %87 = dma.done [#allocation3], 2048
    $region77: #{tpu_custom_call.1} parent=1 // pred_fallthru
      _
    // Predicated region
    $region78: #{tpu_custom_call.1} parent=1 // pred_check
      _
    $region79: #{tpu_custom_call.1} parent=1 // pred_check_branch
      %89 = sbr.rel (0) target = $region81
    $region80: #{tpu_custom_call.1} parent=1 // pred_region
      %91 = dma.done [#allocation6], 4096
    $region81: #{tpu_custom_call.1} parent=1 // pred_fallthru
      _
    %v92 = vld [vmem:[%s0] sm:$0xf]
    %v93 = vld [vmem:[%s5] sm:$0xff]
    %v94 = vld [vmem:[%s5 + $0x8] sm:$0xff]
    %v95 = vld [vmem:[%s5 + $0x10] sm:$0xff]
    %v96 = vld [vmem:[%s5 + $0x18] sm:$0xff]
    %v97 = vld [vmem:[%s1] sm:$0xff]
    %v98 = vld [vmem:[%s1 + $0x8] sm:$0xff]
    %v99 = vld [vmem:[%s1 + $0x10] sm:$0xff]
    %v100 = vld [vmem:[%s1 + $0x18] sm:$0xff]
    %v101 = vld [vmem:[%s1 + $0x20] sm:$0xff]
    %v102 = vld [vmem:[%s1 + $0x28] sm:$0xff]
    %v103 = vld [vmem:[%s1 + $0x30] sm:$0xff]
    %v104 = vld [vmem:[%s1 + $0x38] sm:$0xff]
    %106 = vset.pattern.permute.xlu0 0
    %107 = vperm.xlu0 %106, %v93
    %v108 = vpop.permute.xlu0 %107
    %111 = vset.pattern.permute.xlu0 0
    %112 = vperm.xlu0 %111, %v94
    %v113 = vpop.permute.xlu0 %112
    %116 = vset.pattern.permute.xlu0 0
    %117 = vperm.xlu0 %116, %v95
    %v118 = vpop.permute.xlu0 %117
    %121 = vset.pattern.permute.xlu0 0
    %122 = vperm.xlu0 %121, %v96
    %v123 = vpop.permute.xlu0 %122
    %v126 = vperm.slane %v92, 0
    %v127 = vperm.slane %v92, 2
    %v130 = vperm.slane %v126, 0
    %v131 = vperm.slane %v127, 0
    %v132 = vmul.f32 %v108, %v130
    %v133 = vmul.f32 %v108, %v131
    %v134 = vmul.f32 %v113, %v130
    %v135 = vmul.f32 %v113, %v131
    %v136 = vmul.f32 %v118, %v130
    %v137 = vmul.f32 %v118, %v131
    %v138 = vmul.f32 %v123, %v130
    %v139 = vmul.f32 %v123, %v131
    %v140 = vadd.f32 %v97, %v132
    %v141 = vadd.f32 %v98, %v133
    %v142 = vadd.f32 %v99, %v134
    %v143 = vadd.f32 %v100, %v135
    %v144 = vadd.f32 %v101, %v136
    %v145 = vadd.f32 %v102, %v137
    %v146 = vadd.f32 %v103, %v138
    %v147 = vadd.f32 %v104, %v139
    %148 = vset.pattern.permute.xlu0 1
    %149 = vperm.xlu0 %148, %v93
    %v150 = vpop.permute.xlu0 %149
    %152 = vset.pattern.permute.xlu0 1
    %153 = vperm.xlu0 %152, %v94
    %v154 = vpop.permute.xlu0 %153
    %156 = vset.pattern.permute.xlu0 1
    %157 = vperm.xlu0 %156, %v95
    %v158 = vpop.permute.xlu0 %157
    %160 = vset.pattern.permute.xlu0 1
    %161 = vperm.xlu0 %160, %v96
    %v162 = vpop.permute.xlu0 %161
    %v164 = vperm.slane %v92, 1
    %v165 = vperm.slane %v92, 3
    %v168 = vperm.slane %v164, 1
    %v169 = vperm.slane %v165, 1
    %v170 = vmul.f32 %v150, %v168
    %v171 = vmul.f32 %v150, %v169
    %v172 = vmul.f32 %v154, %v168
    %v173 = vmul.f32 %v154, %v169
    %v174 = vmul.f32 %v158, %v168
    %v175 = vmul.f32 %v158, %v169
    %v176 = vmul.f32 %v162, %v168
    %v177 = vmul.f32 %v162, %v169
    %v178 = vadd.f32 %v140, %v170
    %v179 = vadd.f32 %v141, %v171
    %v180 = vadd.f32 %v142, %v172
    %v181 = vadd.f32 %v143, %v173
    %v182 = vadd.f32 %v144, %v174
    %v183 = vadd.f32 %v145, %v175
    %v184 = vadd.f32 %v146, %v176
    %v185 = vadd.f32 %v147, %v177
    %v186 = vld [vmem:[%s2] sm:$0xff]
    %v187 = vld [vmem:[%s2 + $0x8] sm:$0xff]
    %v188 = vld [vmem:[%s2 + $0x10] sm:$0xff]
    %v189 = vld [vmem:[%s2 + $0x18] sm:$0xff]
    %v190 = vld [vmem:[%s2 + $0x20] sm:$0xff]
    %v191 = vld [vmem:[%s2 + $0x28] sm:$0xff]
    %v192 = vld [vmem:[%s2 + $0x30] sm:$0xff]
    %v193 = vld [vmem:[%s2 + $0x38] sm:$0xff]
    %v194 = vld [vmem:[%s2 + $0x40] sm:$0xff]
    %v195 = vld [vmem:[%s2 + $0x48] sm:$0xff]
    %v196 = vld [vmem:[%s2 + $0x50] sm:$0xff]
    %v197 = vld [vmem:[%s2 + $0x58] sm:$0xff]
    %v198 = vld [vmem:[%s2 + $0x60] sm:$0xff]
    %v199 = vld [vmem:[%s2 + $0x68] sm:$0xff]
    %v200 = vld [vmem:[%s2 + $0x70] sm:$0xff]
    %v201 = vld [vmem:[%s2 + $0x78] sm:$0xff]
    %v202 = vld [vmem:[%s12] sm:$0xff]
    %v203 = vld [vmem:[%s12 + $0x8] sm:$0xff]
    %v204 = vld [vmem:[%s12 + $0x10] sm:$0xff]
    %v205 = vld [vmem:[%s12 + $0x18] sm:$0xff]
    %v206 = vld [vmem:[%s13] sm:$0xff]
    %v207 = vld [vmem:[%s13 + $0x8] sm:$0xff]
    %v208 = vld [vmem:[%s13 + $0x10] sm:$0xff]
    %v209 = vld [vmem:[%s13 + $0x18] sm:$0xff]
    %v210 = vadd.f32 %v178, %v179
    %211 = vadd.xlane.f32.xlu0 %v210
    %v212 = vpop.xlane.xlu0 %211
    %v213 = vadd.f32 %v180, %v181
    %214 = vadd.xlane.f32.xlu0 %v213
    %v215 = vpop.xlane.xlu0 %214
    %v216 = vadd.f32 %v182, %v183
    %217 = vadd.xlane.f32.xlu0 %v216
    %v218 = vpop.xlane.xlu0 %217
    %v219 = vadd.f32 %v184, %v185
    %220 = vadd.xlane.f32.xlu0 %v219
    %v221 = vpop.xlane.xlu0 %220
    %v222 = vmul.f32 %v178, %v178
    %v223 = vmul.f32 %v179, %v179
    %v224 = vmul.f32 %v180, %v180
    %v225 = vmul.f32 %v181, %v181
    %v226 = vmul.f32 %v182, %v182
    %v227 = vmul.f32 %v183, %v183
    %v228 = vmul.f32 %v184, %v184
    %v229 = vmul.f32 %v185, %v185
    %v230 = vadd.f32 %v222, %v223
    %231 = vadd.xlane.f32.xlu0 %v230
    %v232 = vpop.xlane.xlu0 %231
    %v233 = vadd.f32 %v224, %v225
    %234 = vadd.xlane.f32.xlu0 %v233
    %v235 = vpop.xlane.xlu0 %234
    %v236 = vadd.f32 %v226, %v227
    %237 = vadd.xlane.f32.xlu0 %v236
    %v238 = vpop.xlane.xlu0 %237
    %v239 = vadd.f32 %v228, %v229
    %240 = vadd.xlane.f32.xlu0 %v239
    %v241 = vpop.xlane.xlu0 %240
    %v242 = vmul.f32 %v212, 0.00390625
    %v243 = vmul.f32 %v215, 0.00390625
    %v244 = vmul.f32 %v218, 0.00390625
    %v245 = vmul.f32 %v221, 0.00390625
    %v246 = vmul.f32 %v232, 0.00390625
    %v247 = vmul.f32 %v235, 0.00390625
    %v248 = vmul.f32 %v238, 0.00390625
    %v249 = vmul.f32 %v241, 0.00390625
    %v250 = vmul.f32 %v242, %v242
    %v251 = vmul.f32 %v243, %v243
    %v252 = vmul.f32 %v244, %v244
    %v253 = vmul.f32 %v245, %v245
    %v254 = vsub.f32 %v246, %v250
    %v255 = vsub.f32 %v247, %v251
    %v256 = vsub.f32 %v248, %v252
    %v257 = vsub.f32 %v249, %v253
    %v258 = vadd.f32 %v254, 1e-05
    %v259 = vadd.f32 %v255, 1e-05
    %v260 = vadd.f32 %v256, 1e-05
    %v261 = vadd.f32 %v257, 1e-05
    %v262 = vrsqrt.pop %v258
    %v263 = vmul.f32 %v262, %v258
    %v264 = vmul.f32 %v263, %v262
    %v265 = vmul.f32 0.5, %v264
    %v266 = vsub.f32 1.5, %v265
    %v267 = vmul.f32 %v262, %v266
    %vm268 = vweird.f32 %v258
    %vm269 = vweird.f32 %v262
    %vm270 = vmor %vm268, %vm269
    %v271 = vsel %vm270, %v262, %v267
    %v272 = vrsqrt.pop %v259
    %v273 = vmul.f32 %v272, %v259
    %v274 = vmul.f32 %v273, %v272
    %v275 = vmul.f32 0.5, %v274
    %v276 = vsub.f32 1.5, %v275
    %v277 = vmul.f32 %v272, %v276
    %vm278 = vweird.f32 %v259
    %vm279 = vweird.f32 %v272
    %vm280 = vmor %vm278, %vm279
    %v281 = vsel %vm280, %v272, %v277
    %v282 = vrsqrt.pop %v260
    %v283 = vmul.f32 %v282, %v260
    %v284 = vmul.f32 %v283, %v282
    %v285 = vmul.f32 0.5, %v284
    %v286 = vsub.f32 1.5, %v285
    %v287 = vmul.f32 %v282, %v286
    %vm288 = vweird.f32 %v260
    %vm289 = vweird.f32 %v282
    %vm290 = vmor %vm288, %vm289
    %v291 = vsel %vm290, %v282, %v287
    %v292 = vrsqrt.pop %v261
    %v293 = vmul.f32 %v292, %v261
    %v294 = vmul.f32 %v293, %v292
    %v295 = vmul.f32 0.5, %v294
    %v296 = vsub.f32 1.5, %v295
    %v297 = vmul.f32 %v292, %v296
    %vm298 = vweird.f32 %v261
    %vm299 = vweird.f32 %v292
    %vm300 = vmor %vm298, %vm299
    %v301 = vsel %vm300, %v292, %v297
    %v302 = vmul.f32 %v202, %v271
    %v303 = vmul.f32 %v203, %v281
    %v304 = vmul.f32 %v204, %v291
    %v305 = vmul.f32 %v205, %v301
    %v306 = vmul.f32 %v242, %v302
    %v307 = vmul.f32 %v243, %v303
    %v308 = vmul.f32 %v244, %v304
    %v309 = vmul.f32 %v245, %v305
    %v310 = vsub.f32 %v206, %v306
    %v311 = vsub.f32 %v207, %v307
    %v312 = vsub.f32 %v208, %v308
    %v313 = vsub.f32 %v209, %v309
    %315 = vset.pattern.permute.xlu0 0
    %316 = vperm.xlu0 %315, %v302
    %v317 = vpop.permute.xlu0 %316
    %320 = vset.pattern.permute.xlu0 0
    %321 = vperm.xlu0 %320, %v303
    %v322 = vpop.permute.xlu0 %321
    %325 = vset.pattern.permute.xlu0 0
    %326 = vperm.xlu0 %325, %v304
    %v327 = vpop.permute.xlu0 %326
    %330 = vset.pattern.permute.xlu0 0
    %331 = vperm.xlu0 %330, %v305
    %v332 = vpop.permute.xlu0 %331
    %v334 = vmul.f32 %v194, %v317
    %v335 = vmul.f32 %v195, %v317
    %v336 = vmul.f32 %v196, %v322
    %v337 = vmul.f32 %v197, %v322
    %v338 = vmul.f32 %v198, %v327
    %v339 = vmul.f32 %v199, %v327
    %v340 = vmul.f32 %v200, %v332
    %v341 = vmul.f32 %v201, %v332
    %v342 = vadd.f32 %v186, %v334
    %v343 = vadd.f32 %v187, %v335
    %v344 = vadd.f32 %v188, %v336
    %v345 = vadd.f32 %v189, %v337
    %v346 = vadd.f32 %v190, %v338
    %v347 = vadd.f32 %v191, %v339
    %v348 = vadd.f32 %v192, %v340
    %v349 = vadd.f32 %v193, %v341
    %v350 = vmul.f32 %v342, %v178
    %v351 = vmul.f32 %v343, %v179
    %v352 = vmul.f32 %v344, %v180
    %v353 = vmul.f32 %v345, %v181
    %v354 = vmul.f32 %v346, %v182
    %v355 = vmul.f32 %v347, %v183
    %v356 = vmul.f32 %v348, %v184
    %v357 = vmul.f32 %v349, %v185
    %359 = vset.pattern.permute.xlu0 0
    %360 = vperm.xlu0 %359, %v310
    %v361 = vpop.permute.xlu0 %360
    %364 = vset.pattern.permute.xlu0 0
    %365 = vperm.xlu0 %364, %v311
    %v366 = vpop.permute.xlu0 %365
    %369 = vset.pattern.permute.xlu0 0
    %370 = vperm.xlu0 %369, %v312
    %v371 = vpop.permute.xlu0 %370
    %374 = vset.pattern.permute.xlu0 0
    %375 = vperm.xlu0 %374, %v313
    %v376 = vpop.permute.xlu0 %375
    %v378 = vmul.f32 %v194, %v361
    %v379 = vmul.f32 %v195, %v361
    %v380 = vmul.f32 %v196, %v366
    %v381 = vmul.f32 %v197, %v366
    %v382 = vmul.f32 %v198, %v371
    %v383 = vmul.f32 %v199, %v371
    %v384 = vmul.f32 %v200, %v376
    %v385 = vmul.f32 %v201, %v376
    %v386 = vadd.f32 %v350, %v378
    %v387 = vadd.f32 %v351, %v379
    %v388 = vadd.f32 %v352, %v380
    %v389 = vadd.f32 %v353, %v381
    %v390 = vadd.f32 %v354, %v382
    %v391 = vadd.f32 %v355, %v383
    %v392 = vadd.f32 %v356, %v384
    %v393 = vadd.f32 %v357, %v385
    %v394 = vmax.f32 %v386, 0.0
    %v395 = vmax.f32 %v387, 0.0
    %v396 = vmax.f32 %v388, 0.0
    %v397 = vmax.f32 %v389, 0.0
    %v398 = vmax.f32 %v390, 0.0
    %v399 = vmax.f32 %v391, 0.0
    %v400 = vmax.f32 %v392, 0.0
    %v401 = vmax.f32 %v393, 0.0
    %v402 = vld [vmem:[%s6] sm:$0xff]
    %v403 = vld [vmem:[%s6 + $0x8] sm:$0xff]
    %v404 = vld [vmem:[%s6 + $0x10] sm:$0xff]
    %v405 = vld [vmem:[%s6 + $0x18] sm:$0xff]
    %v406 = vld [vmem:[%s7] sm:$0xff]
    %v407 = vld [vmem:[%s7 + $0x8] sm:$0xff]
    %v408 = vld [vmem:[%s7 + $0x10] sm:$0xff]
    %v409 = vld [vmem:[%s7 + $0x18] sm:$0xff]
    %411 = vset.pattern.permute.xlu0 0
    %412 = vperm.xlu0 %411, %v406
    %v413 = vpop.permute.xlu0 %412
    %416 = vset.pattern.permute.xlu0 0
    %417 = vperm.xlu0 %416, %v407
    %v418 = vpop.permute.xlu0 %417
    %421 = vset.pattern.permute.xlu0 0
    %422 = vperm.xlu0 %421, %v408
    %v423 = vpop.permute.xlu0 %422
    %426 = vset.pattern.permute.xlu0 0
    %427 = vperm.xlu0 %426, %v409
    %v428 = vpop.permute.xlu0 %427
    %vm430 = vcmask 261120
    %v432 = vsel %vm430, %v402, 0
    %v435 = vsel %vm430, %v403, 0
    %v438 = vsel %vm430, %v404, 0
    %v441 = vsel %vm430, %v405, 0
    %443 = vmatpush.msra.mxu0 0.0
    %444 = vmatpush.msra.mxu0 0.0
    %445 = vmatpush.msra.mxu0 0.0
    %446 = vmatpush.msra.mxu0 0.0
    %447 = vmatpush.msra.mxu0 0.0
    %448 = vmatpush.msra.mxu0 0.0
    %449 = vmatpush.msra.mxu0 0.0
    %450 = vmatpush.msra.mxu0 0.0
    %451 = vmatpush.msra.mxu0 0.0
    %452 = vmatpush.msra.mxu0 0.0
    %453 = vmatpush.msra.mxu0 0.0
    %454 = vmatpush.msra.mxu0 0.0
    %455 = vmatpush.msra.mxu0 %v400
    %456 = vmatpush.msra.mxu0 %v398
    %457 = vmatpush.msra.mxu0 %v396
    %458 = vmatpush.msra.mxu0 %v394
    %459 = vmatmul.f32.gmra.mxu0 %v432
    %v460 = vpop.f32.mrf.mxu0
    %v461 = vadd.f32 %v413, %v460
    %462 = vmatmul.f32.gmra.mxu0 %v435
    %v463 = vpop.f32.mrf.mxu0
    %v464 = vadd.f32 %v418, %v463
    %465 = vmatmul.f32.gmra.mxu0 %v438
    %v466 = vpop.f32.mrf.mxu0
    %v467 = vadd.f32 %v423, %v466
    %468 = vmatmul.f32.gmra.mxu0 %v441
    %v469 = vpop.f32.mrf.mxu0
    %v470 = vadd.f32 %v428, %v469
    %471 = vdwg.mxu0
    %472 = vmatpush.msra.mxu0 0.0
    %473 = vmatpush.msra.mxu0 0.0
    %474 = vmatpush.msra.mxu0 0.0
    %475 = vmatpush.msra.mxu0 0.0
    %476 = vmatpush.msra.mxu0 0.0
    %477 = vmatpush.msra.mxu0 0.0
    %478 = vmatpush.msra.mxu0 0.0
    %479 = vmatpush.msra.mxu0 0.0
    %480 = vmatpush.msra.mxu0 0.0
    %481 = vmatpush.msra.mxu0 0.0
    %482 = vmatpush.msra.mxu0 0.0
    %483 = vmatpush.msra.mxu0 0.0
    %484 = vmatpush.msra.mxu0 %v401
    %485 = vmatpush.msra.mxu0 %v399
    %486 = vmatpush.msra.mxu0 %v397
    %487 = vmatpush.msra.mxu0 %v395
    %488 = vmatmul.f32.gmra.mxu0 %v432
    %v489 = vpop.f32.mrf.mxu0
    %v490 = vadd.f32 %v413, %v489
    %491 = vmatmul.f32.gmra.mxu0 %v435
    %v492 = vpop.f32.mrf.mxu0
    %v493 = vadd.f32 %v418, %v492
    %494 = vmatmul.f32.gmra.mxu0 %v438
    %v495 = vpop.f32.mrf.mxu0
    %v496 = vadd.f32 %v423, %v495
    %497 = vmatmul.f32.gmra.mxu0 %v441
    %v498 = vpop.f32.mrf.mxu0
    %v499 = vadd.f32 %v428, %v498
    %500 = vdwg.mxu0
    %v501 = vld [vmem:[#allocation2] sm:$0xff]
    %v502 = vld [vmem:[#allocation2 + $0x8] sm:$0xff]
    %v503 = vld [vmem:[#allocation2 + $0x10] sm:$0xff]
    %v504 = vld [vmem:[#allocation2 + $0x18] sm:$0xff]
    %v505 = vld [vmem:[#allocation2 + $0x20] sm:$0xff]
    %v506 = vld [vmem:[#allocation2 + $0x28] sm:$0xff]
    %v507 = vld [vmem:[#allocation2 + $0x30] sm:$0xff]
    %v508 = vld [vmem:[#allocation2 + $0x38] sm:$0xff]
    %v509 = vld [vmem:[#allocation2 + $0x40] sm:$0xff]
    %v510 = vld [vmem:[#allocation2 + $0x48] sm:$0xff]
    %v511 = vld [vmem:[#allocation2 + $0x50] sm:$0xff]
    %v512 = vld [vmem:[#allocation2 + $0x58] sm:$0xff]
    %v513 = vld [vmem:[#allocation2 + $0x60] sm:$0xff]
    %v514 = vld [vmem:[#allocation2 + $0x68] sm:$0xff]
    %v515 = vld [vmem:[#allocation2 + $0x70] sm:$0xff]
    %v516 = vld [vmem:[#allocation2 + $0x78] sm:$0xff]
    %v517 = vld [vmem:[%s14] sm:$0xff]
    %v518 = vld [vmem:[%s14 + $0x8] sm:$0xff]
    %v519 = vld [vmem:[%s14 + $0x10] sm:$0xff]
    %v520 = vld [vmem:[%s14 + $0x18] sm:$0xff]
    %v521 = vld [vmem:[%s15] sm:$0xff]
    %v522 = vld [vmem:[%s15 + $0x8] sm:$0xff]
    %v523 = vld [vmem:[%s15 + $0x10] sm:$0xff]
    %v524 = vld [vmem:[%s15 + $0x18] sm:$0xff]
    %v525 = vadd.f32 %v461, %v490
    %526 = vadd.xlane.f32.xlu0 %v525
    %v527 = vpop.xlane.xlu0 %526
    %v528 = vadd.f32 %v464, %v493
    %529 = vadd.xlane.f32.xlu0 %v528
    %v530 = vpop.xlane.xlu0 %529
    %v531 = vadd.f32 %v467, %v496
    %532 = vadd.xlane.f32.xlu0 %v531
    %v533 = vpop.xlane.xlu0 %532
    %v534 = vadd.f32 %v470, %v499
    %535 = vadd.xlane.f32.xlu0 %v534
    %v536 = vpop.xlane.xlu0 %535
    %v537 = vmul.f32 %v461, %v461
    %v538 = vmul.f32 %v490, %v490
    %v539 = vmul.f32 %v464, %v464
    %v540 = vmul.f32 %v493, %v493
    %v541 = vmul.f32 %v467, %v467
    %v542 = vmul.f32 %v496, %v496
    %v543 = vmul.f32 %v470, %v470
    %v544 = vmul.f32 %v499, %v499
    %v545 = vadd.f32 %v537, %v538
    %546 = vadd.xlane.f32.xlu0 %v545
    %v547 = vpop.xlane.xlu0 %546
    %v548 = vadd.f32 %v539, %v540
    %549 = vadd.xlane.f32.xlu0 %v548
    %v550 = vpop.xlane.xlu0 %549
    %v551 = vadd.f32 %v541, %v542
    %552 = vadd.xlane.f32.xlu0 %v551
    %v553 = vpop.xlane.xlu0 %552
    %v554 = vadd.f32 %v543, %v544
    %555 = vadd.xlane.f32.xlu0 %v554
    %v556 = vpop.xlane.xlu0 %555
    %v557 = vmul.f32 %v527, 0.00390625
    %v558 = vmul.f32 %v530, 0.00390625
    %v559 = vmul.f32 %v533, 0.00390625
    %v560 = vmul.f32 %v536, 0.00390625
    %v561 = vmul.f32 %v547, 0.00390625
    %v562 = vmul.f32 %v550, 0.00390625
    %v563 = vmul.f32 %v553, 0.00390625
    %v564 = vmul.f32 %v556, 0.00390625
    %v565 = vmul.f32 %v557, %v557
    %v566 = vmul.f32 %v558, %v558
    %v567 = vmul.f32 %v559, %v559
    %v568 = vmul.f32 %v560, %v560
    %v569 = vsub.f32 %v561, %v565
    %v570 = vsub.f32 %v562, %v566
    %v571 = vsub.f32 %v563, %v567
    %v572 = vsub.f32 %v564, %v568
    %v573 = vadd.f32 %v569, 1e-05
    %v574 = vadd.f32 %v570, 1e-05
    %v575 = vadd.f32 %v571, 1e-05
    %v576 = vadd.f32 %v572, 1e-05
    %v577 = vrsqrt.pop %v573
    %v578 = vmul.f32 %v577, %v573
    %v579 = vmul.f32 %v578, %v577
    %v580 = vmul.f32 0.5, %v579
    %v581 = vsub.f32 1.5, %v580
    %v582 = vmul.f32 %v577, %v581
    %vm583 = vweird.f32 %v573
    %vm584 = vweird.f32 %v577
    %vm585 = vmor %vm583, %vm584
    %v586 = vsel %vm585, %v577, %v582
    %v587 = vrsqrt.pop %v574
    %v588 = vmul.f32 %v587, %v574
    %v589 = vmul.f32 %v588, %v587
    %v590 = vmul.f32 0.5, %v589
    %v591 = vsub.f32 1.5, %v590
    %v592 = vmul.f32 %v587, %v591
    %vm593 = vweird.f32 %v574
    %vm594 = vweird.f32 %v587
    %vm595 = vmor %vm593, %vm594
    %v596 = vsel %vm595, %v587, %v592
    %v597 = vrsqrt.pop %v575
    %v598 = vmul.f32 %v597, %v575
    %v599 = vmul.f32 %v598, %v597
    %v600 = vmul.f32 0.5, %v599
    %v601 = vsub.f32 1.5, %v600
    %v602 = vmul.f32 %v597, %v601
    %vm603 = vweird.f32 %v575
    %vm604 = vweird.f32 %v597
    %vm605 = vmor %vm603, %vm604
    %v606 = vsel %vm605, %v597, %v602
    %v607 = vrsqrt.pop %v576
    %v608 = vmul.f32 %v607, %v576
    %v609 = vmul.f32 %v608, %v607
    %v610 = vmul.f32 0.5, %v609
    %v611 = vsub.f32 1.5, %v610
    %v612 = vmul.f32 %v607, %v611
    %vm613 = vweird.f32 %v576
    %vm614 = vweird.f32 %v607
    %vm615 = vmor %vm613, %vm614
    %v616 = vsel %vm615, %v607, %v612
    %v617 = vmul.f32 %v517, %v586
    %v618 = vmul.f32 %v518, %v596
    %v619 = vmul.f32 %v519, %v606
    %v620 = vmul.f32 %v520, %v616
    %v621 = vmul.f32 %v557, %v617
    %v622 = vmul.f32 %v558, %v618
    %v623 = vmul.f32 %v559, %v619
    %v624 = vmul.f32 %v560, %v620
    %v625 = vsub.f32 %v521, %v621
    %v626 = vsub.f32 %v522, %v622
    %v627 = vsub.f32 %v523, %v623
    %v628 = vsub.f32 %v524, %v624
    %630 = vset.pattern.permute.xlu0 0
    %631 = vperm.xlu0 %630, %v617
    %v632 = vpop.permute.xlu0 %631
    %635 = vset.pattern.permute.xlu0 0
    %636 = vperm.xlu0 %635, %v618
    %v637 = vpop.permute.xlu0 %636
    %640 = vset.pattern.permute.xlu0 0
    %641 = vperm.xlu0 %640, %v619
    %v642 = vpop.permute.xlu0 %641
    %645 = vset.pattern.permute.xlu0 0
    %646 = vperm.xlu0 %645, %v620
    %v647 = vpop.permute.xlu0 %646
    %v649 = vmul.f32 %v509, %v632
    %v650 = vmul.f32 %v510, %v632
    %v651 = vmul.f32 %v511, %v637
    %v652 = vmul.f32 %v512, %v637
    %v653 = vmul.f32 %v513, %v642
    %v654 = vmul.f32 %v514, %v642
    %v655 = vmul.f32 %v515, %v647
    %v656 = vmul.f32 %v516, %v647
    %v657 = vadd.f32 %v501, %v649
    %v658 = vadd.f32 %v502, %v650
    %v659 = vadd.f32 %v503, %v651
    %v660 = vadd.f32 %v504, %v652
    %v661 = vadd.f32 %v505, %v653
    %v662 = vadd.f32 %v506, %v654
    %v663 = vadd.f32 %v507, %v655
    %v664 = vadd.f32 %v508, %v656
    %v665 = vmul.f32 %v657, %v461
    %v666 = vmul.f32 %v658, %v490
    %v667 = vmul.f32 %v659, %v464
    %v668 = vmul.f32 %v660, %v493
    %v669 = vmul.f32 %v661, %v467
    %v670 = vmul.f32 %v662, %v496
    %v671 = vmul.f32 %v663, %v470
    %v672 = vmul.f32 %v664, %v499
    %674 = vset.pattern.permute.xlu0 0
    %675 = vperm.xlu0 %674, %v625
    %v676 = vpop.permute.xlu0 %675
    %679 = vset.pattern.permute.xlu0 0
    %680 = vperm.xlu0 %679, %v626
    %v681 = vpop.permute.xlu0 %680
    %684 = vset.pattern.permute.xlu0 0
    %685 = vperm.xlu0 %684, %v627
    %v686 = vpop.permute.xlu0 %685
    %689 = vset.pattern.permute.xlu0 0
    %690 = vperm.xlu0 %689, %v628
    %v691 = vpop.permute.xlu0 %690
    %v693 = vmul.f32 %v509, %v676
    %v694 = vmul.f32 %v510, %v676
    %v695 = vmul.f32 %v511, %v681
    %v696 = vmul.f32 %v512, %v681
    %v697 = vmul.f32 %v513, %v686
    %v698 = vmul.f32 %v514, %v686
    %v699 = vmul.f32 %v515, %v691
    %v700 = vmul.f32 %v516, %v691
    %v701 = vadd.f32 %v665, %v693
    %v702 = vadd.f32 %v666, %v694
    %v703 = vadd.f32 %v667, %v695
    %v704 = vadd.f32 %v668, %v696
    %v705 = vadd.f32 %v669, %v697
    %v706 = vadd.f32 %v670, %v698
    %v707 = vadd.f32 %v671, %v699
    %v708 = vadd.f32 %v672, %v700
    %v709 = vmax.f32 %v701, 0.0
    %v710 = vmax.f32 %v702, 0.0
    %v711 = vmax.f32 %v703, 0.0
    %v712 = vmax.f32 %v704, 0.0
    %v713 = vmax.f32 %v705, 0.0
    %v714 = vmax.f32 %v706, 0.0
    %v715 = vmax.f32 %v707, 0.0
    %v716 = vmax.f32 %v708, 0.0
    %v717 = vld [vmem:[%s8] sm:$0xff]
    %v718 = vld [vmem:[%s8 + $0x8] sm:$0xff]
    %v719 = vld [vmem:[%s8 + $0x10] sm:$0xff]
    %v720 = vld [vmem:[%s8 + $0x18] sm:$0xff]
    %v721 = vld [vmem:[%s9] sm:$0xff]
    %v722 = vld [vmem:[%s9 + $0x8] sm:$0xff]
    %v723 = vld [vmem:[%s9 + $0x10] sm:$0xff]
    %v724 = vld [vmem:[%s9 + $0x18] sm:$0xff]
    %726 = vset.pattern.permute.xlu0 0
    %727 = vperm.xlu0 %726, %v721
    %v728 = vpop.permute.xlu0 %727
    %731 = vset.pattern.permute.xlu0 0
    %732 = vperm.xlu0 %731, %v722
    %v733 = vpop.permute.xlu0 %732
    %736 = vset.pattern.permute.xlu0 0
    %737 = vperm.xlu0 %736, %v723
    %v738 = vpop.permute.xlu0 %737
    %741 = vset.pattern.permute.xlu0 0
    %742 = vperm.xlu0 %741, %v724
    %v743 = vpop.permute.xlu0 %742
    %v746 = vsel %vm430, %v717, 0
    %v749 = vsel %vm430, %v718, 0
    %v752 = vsel %vm430, %v719, 0
    %v755 = vsel %vm430, %v720, 0
    %757 = vmatpush.msra.mxu0 0.0
    %758 = vmatpush.msra.mxu0 0.0
    %759 = vmatpush.msra.mxu0 0.0
    %760 = vmatpush.msra.mxu0 0.0
    %761 = vmatpush.msra.mxu0 0.0
    %762 = vmatpush.msra.mxu0 0.0
    %763 = vmatpush.msra.mxu0 0.0
    %764 = vmatpush.msra.mxu0 0.0
    %765 = vmatpush.msra.mxu0 0.0
    %766 = vmatpush.msra.mxu0 0.0
    %767 = vmatpush.msra.mxu0 0.0
    %768 = vmatpush.msra.mxu0 0.0
    %769 = vmatpush.msra.mxu0 %v715
    %770 = vmatpush.msra.mxu0 %v713
    %771 = vmatpush.msra.mxu0 %v711
    %772 = vmatpush.msra.mxu0 %v709
    %773 = vmatmul.f32.gmra.mxu0 %v746
    %v774 = vpop.f32.mrf.mxu0
    %v775 = vadd.f32 %v728, %v774
    %776 = vmatmul.f32.gmra.mxu0 %v749
    %v777 = vpop.f32.mrf.mxu0
    %v778 = vadd.f32 %v733, %v777
    %779 = vmatmul.f32.gmra.mxu0 %v752
    %v780 = vpop.f32.mrf.mxu0
    %v781 = vadd.f32 %v738, %v780
    %782 = vmatmul.f32.gmra.mxu0 %v755
    %v783 = vpop.f32.mrf.mxu0
    %v784 = vadd.f32 %v743, %v783
    %785 = vdwg.mxu0
    %786 = vmatpush.msra.mxu0 0.0
    %787 = vmatpush.msra.mxu0 0.0
    %788 = vmatpush.msra.mxu0 0.0
    %789 = vmatpush.msra.mxu0 0.0
    %790 = vmatpush.msra.mxu0 0.0
    %791 = vmatpush.msra.mxu0 0.0
    %792 = vmatpush.msra.mxu0 0.0
    %793 = vmatpush.msra.mxu0 0.0
    %794 = vmatpush.msra.mxu0 0.0
    %795 = vmatpush.msra.mxu0 0.0
    %796 = vmatpush.msra.mxu0 0.0
    %797 = vmatpush.msra.mxu0 0.0
    %798 = vmatpush.msra.mxu0 %v716
    %799 = vmatpush.msra.mxu0 %v714
    %800 = vmatpush.msra.mxu0 %v712
    %801 = vmatpush.msra.mxu0 %v710
    %802 = vmatmul.f32.gmra.mxu0 %v746
    %v803 = vpop.f32.mrf.mxu0
    %v804 = vadd.f32 %v728, %v803
    %805 = vmatmul.f32.gmra.mxu0 %v749
    %v806 = vpop.f32.mrf.mxu0
    %v807 = vadd.f32 %v733, %v806
    %808 = vmatmul.f32.gmra.mxu0 %v752
    %v809 = vpop.f32.mrf.mxu0
    %v810 = vadd.f32 %v738, %v809
    %811 = vmatmul.f32.gmra.mxu0 %v755
    %v812 = vpop.f32.mrf.mxu0
    %v813 = vadd.f32 %v743, %v812
    %814 = vdwg.mxu0
    %v815 = vld [vmem:[#allocation5] sm:$0xff]
    %v816 = vld [vmem:[#allocation5 + $0x8] sm:$0xff]
    %v817 = vld [vmem:[#allocation5 + $0x10] sm:$0xff]
    %v818 = vld [vmem:[#allocation5 + $0x18] sm:$0xff]
    %v819 = vld [vmem:[#allocation5 + $0x20] sm:$0xff]
    %v820 = vld [vmem:[#allocation5 + $0x28] sm:$0xff]
    %v821 = vld [vmem:[#allocation5 + $0x30] sm:$0xff]
    %v822 = vld [vmem:[#allocation5 + $0x38] sm:$0xff]
    %v823 = vld [vmem:[#allocation5 + $0x40] sm:$0xff]
    %v824 = vld [vmem:[#allocation5 + $0x48] sm:$0xff]
    %v825 = vld [vmem:[#allocation5 + $0x50] sm:$0xff]
    %v826 = vld [vmem:[#allocation5 + $0x58] sm:$0xff]
    %v827 = vld [vmem:[#allocation5 + $0x60] sm:$0xff]
    %v828 = vld [vmem:[#allocation5 + $0x68] sm:$0xff]
    %v829 = vld [vmem:[#allocation5 + $0x70] sm:$0xff]
    %v830 = vld [vmem:[#allocation5 + $0x78] sm:$0xff]
    %v831 = vld [vmem:[%s16] sm:$0xff]
    %v832 = vld [vmem:[%s16 + $0x8] sm:$0xff]
    %v833 = vld [vmem:[%s16 + $0x10] sm:$0xff]
    %v834 = vld [vmem:[%s16 + $0x18] sm:$0xff]
    %v835 = vld [vmem:[%s17] sm:$0xff]
    %v836 = vld [vmem:[%s17 + $0x8] sm:$0xff]
    %v837 = vld [vmem:[%s17 + $0x10] sm:$0xff]
    %v838 = vld [vmem:[%s17 + $0x18] sm:$0xff]
    %v839 = vadd.f32 %v775, %v804
    %840 = vadd.xlane.f32.xlu0 %v839
    %v841 = vpop.xlane.xlu0 %840
    %v842 = vadd.f32 %v778, %v807
    %843 = vadd.xlane.f32.xlu0 %v842
    %v844 = vpop.xlane.xlu0 %843
    %v845 = vadd.f32 %v781, %v810
    %846 = vadd.xlane.f32.xlu0 %v845
    %v847 = vpop.xlane.xlu0 %846
    %v848 = vadd.f32 %v784, %v813
    %849 = vadd.xlane.f32.xlu0 %v848
    %v850 = vpop.xlane.xlu0 %849
    %v851 = vmul.f32 %v775, %v775
    %v852 = vmul.f32 %v804, %v804
    %v853 = vmul.f32 %v778, %v778
    %v854 = vmul.f32 %v807, %v807
    %v855 = vmul.f32 %v781, %v781
    %v856 = vmul.f32 %v810, %v810
    %v857 = vmul.f32 %v784, %v784
    %v858 = vmul.f32 %v813, %v813
    %v859 = vadd.f32 %v851, %v852
    %860 = vadd.xlane.f32.xlu0 %v859
    %v861 = vpop.xlane.xlu0 %860
    %v862 = vadd.f32 %v853, %v854
    %863 = vadd.xlane.f32.xlu0 %v862
    %v864 = vpop.xlane.xlu0 %863
    %v865 = vadd.f32 %v855, %v856
    %866 = vadd.xlane.f32.xlu0 %v865
    %v867 = vpop.xlane.xlu0 %866
    %v868 = vadd.f32 %v857, %v858
    %869 = vadd.xlane.f32.xlu0 %v868
    %v870 = vpop.xlane.xlu0 %869
    %v871 = vmul.f32 %v841, 0.00390625
    %v872 = vmul.f32 %v844, 0.00390625
    %v873 = vmul.f32 %v847, 0.00390625
    %v874 = vmul.f32 %v850, 0.00390625
    %v875 = vmul.f32 %v861, 0.00390625
    %v876 = vmul.f32 %v864, 0.00390625
    %v877 = vmul.f32 %v867, 0.00390625
    %v878 = vmul.f32 %v870, 0.00390625
    %v879 = vmul.f32 %v871, %v871
    %v880 = vmul.f32 %v872, %v872
    %v881 = vmul.f32 %v873, %v873
    %v882 = vmul.f32 %v874, %v874
    %v883 = vsub.f32 %v875, %v879
    %v884 = vsub.f32 %v876, %v880
    %v885 = vsub.f32 %v877, %v881
    %v886 = vsub.f32 %v878, %v882
    %v887 = vadd.f32 %v883, 1e-05
    %v888 = vadd.f32 %v884, 1e-05
    %v889 = vadd.f32 %v885, 1e-05
    %v890 = vadd.f32 %v886, 1e-05
    %v891 = vrsqrt.pop %v887
    %v892 = vmul.f32 %v891, %v887
    %v893 = vmul.f32 %v892, %v891
    %v894 = vmul.f32 0.5, %v893
    %v895 = vsub.f32 1.5, %v894
    %v896 = vmul.f32 %v891, %v895
    %vm897 = vweird.f32 %v887
    %vm898 = vweird.f32 %v891
    %vm899 = vmor %vm897, %vm898
    %v900 = vsel %vm899, %v891, %v896
    %v901 = vrsqrt.pop %v888
    %v902 = vmul.f32 %v901, %v888
    %v903 = vmul.f32 %v902, %v901
    %v904 = vmul.f32 0.5, %v903
    %v905 = vsub.f32 1.5, %v904
    %v906 = vmul.f32 %v901, %v905
    %vm907 = vweird.f32 %v888
    %vm908 = vweird.f32 %v901
    %vm909 = vmor %vm907, %vm908
    %v910 = vsel %vm909, %v901, %v906
    %v911 = vrsqrt.pop %v889
    %v912 = vmul.f32 %v911, %v889
    %v913 = vmul.f32 %v912, %v911
    %v914 = vmul.f32 0.5, %v913
    %v915 = vsub.f32 1.5, %v914
    %v916 = vmul.f32 %v911, %v915
    %vm917 = vweird.f32 %v889
    %vm918 = vweird.f32 %v911
    %vm919 = vmor %vm917, %vm918
    %v920 = vsel %vm919, %v911, %v916
    %v921 = vrsqrt.pop %v890
    %v922 = vmul.f32 %v921, %v890
    %v923 = vmul.f32 %v922, %v921
    %v924 = vmul.f32 0.5, %v923
    %v925 = vsub.f32 1.5, %v924
    %v926 = vmul.f32 %v921, %v925
    %vm927 = vweird.f32 %v890
    %vm928 = vweird.f32 %v921
    %vm929 = vmor %vm927, %vm928
    %v930 = vsel %vm929, %v921, %v926
    %v931 = vmul.f32 %v831, %v900
    %v932 = vmul.f32 %v832, %v910
    %v933 = vmul.f32 %v833, %v920
    %v934 = vmul.f32 %v834, %v930
    %v935 = vmul.f32 %v871, %v931
    %v936 = vmul.f32 %v872, %v932
    %v937 = vmul.f32 %v873, %v933
    %v938 = vmul.f32 %v874, %v934
    %v939 = vsub.f32 %v835, %v935
    %v940 = vsub.f32 %v836, %v936
    %v941 = vsub.f32 %v837, %v937
    %v942 = vsub.f32 %v838, %v938
    %944 = vset.pattern.permute.xlu0 0
    %945 = vperm.xlu0 %944, %v931
    %v946 = vpop.permute.xlu0 %945
    %949 = vset.pattern.permute.xlu0 0
    %950 = vperm.xlu0 %949, %v932
    %v951 = vpop.permute.xlu0 %950
    %954 = vset.pattern.permute.xlu0 0
    %955 = vperm.xlu0 %954, %v933
    %v956 = vpop.permute.xlu0 %955
    %959 = vset.pattern.permute.xlu0 0
    %960 = vperm.xlu0 %959, %v934
    %v961 = vpop.permute.xlu0 %960
    %v963 = vmul.f32 %v823, %v946
    %v964 = vmul.f32 %v824, %v946
    %v965 = vmul.f32 %v825, %v951
    %v966 = vmul.f32 %v826, %v951
    %v967 = vmul.f32 %v827, %v956
    %v968 = vmul.f32 %v828, %v956
    %v969 = vmul.f32 %v829, %v961
    %v970 = vmul.f32 %v830, %v961
    %v971 = vadd.f32 %v815, %v963
    %v972 = vadd.f32 %v816, %v964
    %v973 = vadd.f32 %v817, %v965
    %v974 = vadd.f32 %v818, %v966
    %v975 = vadd.f32 %v819, %v967
    %v976 = vadd.f32 %v820, %v968
    %v977 = vadd.f32 %v821, %v969
    %v978 = vadd.f32 %v822, %v970
    %v979 = vmul.f32 %v971, %v775
    %v980 = vmul.f32 %v972, %v804
    %v981 = vmul.f32 %v973, %v778
    %v982 = vmul.f32 %v974, %v807
    %v983 = vmul.f32 %v975, %v781
    %v984 = vmul.f32 %v976, %v810
    %v985 = vmul.f32 %v977, %v784
    %v986 = vmul.f32 %v978, %v813
    %988 = vset.pattern.permute.xlu0 0
    %989 = vperm.xlu0 %988, %v939
    %v990 = vpop.permute.xlu0 %989
    %993 = vset.pattern.permute.xlu0 0
    %994 = vperm.xlu0 %993, %v940
    %v995 = vpop.permute.xlu0 %994
    %998 = vset.pattern.permute.xlu0 0
    %999 = vperm.xlu0 %998, %v941
    %v1000 = vpop.permute.xlu0 %999
    %1003 = vset.pattern.permute.xlu0 0
    %1004 = vperm.xlu0 %1003, %v942
    %v1005 = vpop.permute.xlu0 %1004
    %v1007 = vmul.f32 %v823, %v990
    %v1008 = vmul.f32 %v824, %v990
    %v1009 = vmul.f32 %v825, %v995
    %v1010 = vmul.f32 %v826, %v995
    %v1011 = vmul.f32 %v827, %v1000
    %v1012 = vmul.f32 %v828, %v1000
    %v1013 = vmul.f32 %v829, %v1005
    %v1014 = vmul.f32 %v830, %v1005
    %v1015 = vadd.f32 %v979, %v1007
    %v1016 = vadd.f32 %v980, %v1008
    %v1017 = vadd.f32 %v981, %v1009
    %v1018 = vadd.f32 %v982, %v1010
    %v1019 = vadd.f32 %v983, %v1011
    %v1020 = vadd.f32 %v984, %v1012
    %v1021 = vadd.f32 %v985, %v1013
    %v1022 = vadd.f32 %v986, %v1014
    %v1023 = vmax.f32 %v1015, 0.0
    %v1024 = vmax.f32 %v1016, 0.0
    %v1025 = vmax.f32 %v1017, 0.0
    %v1026 = vmax.f32 %v1018, 0.0
    %v1027 = vmax.f32 %v1019, 0.0
    %v1028 = vmax.f32 %v1020, 0.0
    %v1029 = vmax.f32 %v1021, 0.0
    %v1030 = vmax.f32 %v1022, 0.0
    %s1031 = scalar_lea.vmem %s8, 32
    %v1032 = vld [vmem:[%s1031] sm:$0xff]
    %v1033 = vld [vmem:[%s1031 + $0x8] sm:$0xff]
    %v1034 = vld [vmem:[%s1031 + $0x10] sm:$0xff]
    %v1035 = vld [vmem:[%s1031 + $0x18] sm:$0xff]
    %s1036 = scalar_lea.vmem %s9, 32
    %v1037 = vld [vmem:[%s1036] sm:$0xff]
    %v1038 = vld [vmem:[%s1036 + $0x8] sm:$0xff]
    %v1039 = vld [vmem:[%s1036 + $0x10] sm:$0xff]
    %v1040 = vld [vmem:[%s1036 + $0x18] sm:$0xff]
    %1042 = vset.pattern.permute.xlu0 0
    %1043 = vperm.xlu0 %1042, %v1037
    %v1044 = vpop.permute.xlu0 %1043
    %1047 = vset.pattern.permute.xlu0 0
    %1048 = vperm.xlu0 %1047, %v1038
    %v1049 = vpop.permute.xlu0 %1048
    %1052 = vset.pattern.permute.xlu0 0
    %1053 = vperm.xlu0 %1052, %v1039
    %v1054 = vpop.permute.xlu0 %1053
    %1057 = vset.pattern.permute.xlu0 0
    %1058 = vperm.xlu0 %1057, %v1040
    %v1059 = vpop.permute.xlu0 %1058
    %v1062 = vsel %vm430, %v1032, 0
    %v1065 = vsel %vm430, %v1033, 0
    %v1068 = vsel %vm430, %v1034, 0
    %v1071 = vsel %vm430, %v1035, 0
    %1073 = vmatpush.msra.mxu0 0.0
    %1074 = vmatpush.msra.mxu0 0.0
    %1075 = vmatpush.msra.mxu0 0.0
    %1076 = vmatpush.msra.mxu0 0.0
    %1077 = vmatpush.msra.mxu0 0.0
    %1078 = vmatpush.msra.mxu0 0.0
    %1079 = vmatpush.msra.mxu0 0.0
    %1080 = vmatpush.msra.mxu0 0.0
    %1081 = vmatpush.msra.mxu0 0.0
    %1082 = vmatpush.msra.mxu0 0.0
    %1083 = vmatpush.msra.mxu0 0.0
    %1084 = vmatpush.msra.mxu0 0.0
    %1085 = vmatpush.msra.mxu0 %v1029
    %1086 = vmatpush.msra.mxu0 %v1027
    %1087 = vmatpush.msra.mxu0 %v1025
    %1088 = vmatpush.msra.mxu0 %v1023
    %1089 = vmatmul.f32.gmra.mxu0 %v1062
    %v1090 = vpop.f32.mrf.mxu0
    %v1091 = vadd.f32 %v1044, %v1090
    %1092 = vmatmul.f32.gmra.mxu0 %v1065
    %v1093 = vpop.f32.mrf.mxu0
    %v1094 = vadd.f32 %v1049, %v1093
    %1095 = vmatmul.f32.gmra.mxu0 %v1068
    %v1096 = vpop.f32.mrf.mxu0
    %v1097 = vadd.f32 %v1054, %v1096
    %1098 = vmatmul.f32.gmra.mxu0 %v1071
    %v1099 = vpop.f32.mrf.mxu0
    %v1100 = vadd.f32 %v1059, %v1099
    %1101 = vdwg.mxu0
    %1102 = vmatpush.msra.mxu0 0.0
    %1103 = vmatpush.msra.mxu0 0.0
    %1104 = vmatpush.msra.mxu0 0.0
    %1105 = vmatpush.msra.mxu0 0.0
    %1106 = vmatpush.msra.mxu0 0.0
    %1107 = vmatpush.msra.mxu0 0.0
    %1108 = vmatpush.msra.mxu0 0.0
    %1109 = vmatpush.msra.mxu0 0.0
    %1110 = vmatpush.msra.mxu0 0.0
    %1111 = vmatpush.msra.mxu0 0.0
    %1112 = vmatpush.msra.mxu0 0.0
    %1113 = vmatpush.msra.mxu0 0.0
    %1114 = vmatpush.msra.mxu0 %v1030
    %1115 = vmatpush.msra.mxu0 %v1028
    %1116 = vmatpush.msra.mxu0 %v1026
    %1117 = vmatpush.msra.mxu0 %v1024
    %1118 = vmatmul.f32.gmra.mxu0 %v1062
    %v1119 = vpop.f32.mrf.mxu0
    %v1120 = vadd.f32 %v1044, %v1119
    %1121 = vmatmul.f32.gmra.mxu0 %v1065
    %v1122 = vpop.f32.mrf.mxu0
    %v1123 = vadd.f32 %v1049, %v1122
    %1124 = vmatmul.f32.gmra.mxu0 %v1068
    %v1125 = vpop.f32.mrf.mxu0
    %v1126 = vadd.f32 %v1054, %v1125
    %1127 = vmatmul.f32.gmra.mxu0 %v1071
    %v1128 = vpop.f32.mrf.mxu0
    %v1129 = vadd.f32 %v1059, %v1128
    %1130 = vdwg.mxu0
    %s1131 = scalar_lea.vmem [#allocation5], 128
    %v1132 = vld [vmem:[%s1131] sm:$0xff]
    %v1133 = vld [vmem:[%s1131 + $0x8] sm:$0xff]
    %v1134 = vld [vmem:[%s1131 + $0x10] sm:$0xff]
    %v1135 = vld [vmem:[%s1131 + $0x18] sm:$0xff]
    %v1136 = vld [vmem:[%s1131 + $0x20] sm:$0xff]
    %v1137 = vld [vmem:[%s1131 + $0x28] sm:$0xff]
    %v1138 = vld [vmem:[%s1131 + $0x30] sm:$0xff]
    %v1139 = vld [vmem:[%s1131 + $0x38] sm:$0xff]
    %v1140 = vld [vmem:[%s1131 + $0x40] sm:$0xff]
    %v1141 = vld [vmem:[%s1131 + $0x48] sm:$0xff]
    %v1142 = vld [vmem:[%s1131 + $0x50] sm:$0xff]
    %v1143 = vld [vmem:[%s1131 + $0x58] sm:$0xff]
    %v1144 = vld [vmem:[%s1131 + $0x60] sm:$0xff]
    %v1145 = vld [vmem:[%s1131 + $0x68] sm:$0xff]
    %v1146 = vld [vmem:[%s1131 + $0x70] sm:$0xff]
    %v1147 = vld [vmem:[%s1131 + $0x78] sm:$0xff]
    %s1148 = scalar_lea.vmem %s16, 32
    %v1149 = vld [vmem:[%s1148] sm:$0xff]
    %v1150 = vld [vmem:[%s1148 + $0x8] sm:$0xff]
    %v1151 = vld [vmem:[%s1148 + $0x10] sm:$0xff]
    %v1152 = vld [vmem:[%s1148 + $0x18] sm:$0xff]
    %s1153 = scalar_lea.vmem %s17, 32
    %v1154 = vld [vmem:[%s1153] sm:$0xff]
    %v1155 = vld [vmem:[%s1153 + $0x8] sm:$0xff]
    %v1156 = vld [vmem:[%s1153 + $0x10] sm:$0xff]
    %v1157 = vld [vmem:[%s1153 + $0x18] sm:$0xff]
    %v1158 = vadd.f32 %v1091, %v1120
    %1159 = vadd.xlane.f32.xlu0 %v1158
    %v1160 = vpop.xlane.xlu0 %1159
    %v1161 = vadd.f32 %v1094, %v1123
    %1162 = vadd.xlane.f32.xlu0 %v1161
    %v1163 = vpop.xlane.xlu0 %1162
    %v1164 = vadd.f32 %v1097, %v1126
    %1165 = vadd.xlane.f32.xlu0 %v1164
    %v1166 = vpop.xlane.xlu0 %1165
    %v1167 = vadd.f32 %v1100, %v1129
    %1168 = vadd.xlane.f32.xlu0 %v1167
    %v1169 = vpop.xlane.xlu0 %1168
    %v1170 = vmul.f32 %v1091, %v1091
    %v1171 = vmul.f32 %v1120, %v1120
    %v1172 = vmul.f32 %v1094, %v1094
    %v1173 = vmul.f32 %v1123, %v1123
    %v1174 = vmul.f32 %v1097, %v1097
    %v1175 = vmul.f32 %v1126, %v1126
    %v1176 = vmul.f32 %v1100, %v1100
    %v1177 = vmul.f32 %v1129, %v1129
    %v1178 = vadd.f32 %v1170, %v1171
    %1179 = vadd.xlane.f32.xlu0 %v1178
    %v1180 = vpop.xlane.xlu0 %1179
    %v1181 = vadd.f32 %v1172, %v1173
    %1182 = vadd.xlane.f32.xlu0 %v1181
    %v1183 = vpop.xlane.xlu0 %1182
    %v1184 = vadd.f32 %v1174, %v1175
    %1185 = vadd.xlane.f32.xlu0 %v1184
    %v1186 = vpop.xlane.xlu0 %1185
    %v1187 = vadd.f32 %v1176, %v1177
    %1188 = vadd.xlane.f32.xlu0 %v1187
    %v1189 = vpop.xlane.xlu0 %1188
    %v1190 = vmul.f32 %v1160, 0.00390625
    %v1191 = vmul.f32 %v1163, 0.00390625
    %v1192 = vmul.f32 %v1166, 0.00390625
    %v1193 = vmul.f32 %v1169, 0.00390625
    %v1194 = vmul.f32 %v1180, 0.00390625
    %v1195 = vmul.f32 %v1183, 0.00390625
    %v1196 = vmul.f32 %v1186, 0.00390625
    %v1197 = vmul.f32 %v1189, 0.00390625
    %v1198 = vmul.f32 %v1190, %v1190
    %v1199 = vmul.f32 %v1191, %v1191
    %v1200 = vmul.f32 %v1192, %v1192
    %v1201 = vmul.f32 %v1193, %v1193
    %v1202 = vsub.f32 %v1194, %v1198
    %v1203 = vsub.f32 %v1195, %v1199
    %v1204 = vsub.f32 %v1196, %v1200
    %v1205 = vsub.f32 %v1197, %v1201
    %v1206 = vadd.f32 %v1202, 1e-05
    %v1207 = vadd.f32 %v1203, 1e-05
    %v1208 = vadd.f32 %v1204, 1e-05
    %v1209 = vadd.f32 %v1205, 1e-05
    %v1210 = vrsqrt.pop %v1206
    %v1211 = vmul.f32 %v1210, %v1206
    %v1212 = vmul.f32 %v1211, %v1210
    %v1213 = vmul.f32 0.5, %v1212
    %v1214 = vsub.f32 1.5, %v1213
    %v1215 = vmul.f32 %v1210, %v1214
    %vm1216 = vweird.f32 %v1206
    %vm1217 = vweird.f32 %v1210
    %vm1218 = vmor %vm1216, %vm1217
    %v1219 = vsel %vm1218, %v1210, %v1215
    %v1220 = vrsqrt.pop %v1207
    %v1221 = vmul.f32 %v1220, %v1207
    %v1222 = vmul.f32 %v1221, %v1220
    %v1223 = vmul.f32 0.5, %v1222
    %v1224 = vsub.f32 1.5, %v1223
    %v1225 = vmul.f32 %v1220, %v1224
    %vm1226 = vweird.f32 %v1207
    %vm1227 = vweird.f32 %v1220
    %vm1228 = vmor %vm1226, %vm1227
    %v1229 = vsel %vm1228, %v1220, %v1225
    %v1230 = vrsqrt.pop %v1208
    %v1231 = vmul.f32 %v1230, %v1208
    %v1232 = vmul.f32 %v1231, %v1230
    %v1233 = vmul.f32 0.5, %v1232
    %v1234 = vsub.f32 1.5, %v1233
    %v1235 = vmul.f32 %v1230, %v1234
    %vm1236 = vweird.f32 %v1208
    %vm1237 = vweird.f32 %v1230
    %vm1238 = vmor %vm1236, %vm1237
    %v1239 = vsel %vm1238, %v1230, %v1235
    %v1240 = vrsqrt.pop %v1209
    %v1241 = vmul.f32 %v1240, %v1209
    %v1242 = vmul.f32 %v1241, %v1240
    %v1243 = vmul.f32 0.5, %v1242
    %v1244 = vsub.f32 1.5, %v1243
    %v1245 = vmul.f32 %v1240, %v1244
    %vm1246 = vweird.f32 %v1209
    %vm1247 = vweird.f32 %v1240
    %vm1248 = vmor %vm1246, %vm1247
    %v1249 = vsel %vm1248, %v1240, %v1245
    %v1250 = vmul.f32 %v1149, %v1219
    %v1251 = vmul.f32 %v1150, %v1229
    %v1252 = vmul.f32 %v1151, %v1239
    %v1253 = vmul.f32 %v1152, %v1249
    %v1254 = vmul.f32 %v1190, %v1250
    %v1255 = vmul.f32 %v1191, %v1251
    %v1256 = vmul.f32 %v1192, %v1252
    %v1257 = vmul.f32 %v1193, %v1253
    %v1258 = vsub.f32 %v1154, %v1254
    %v1259 = vsub.f32 %v1155, %v1255
    %v1260 = vsub.f32 %v1156, %v1256
    %v1261 = vsub.f32 %v1157, %v1257
    %1263 = vset.pattern.permute.xlu0 0
    %1264 = vperm.xlu0 %1263, %v1250
    %v1265 = vpop.permute.xlu0 %1264
    %1268 = vset.pattern.permute.xlu0 0
    %1269 = vperm.xlu0 %1268, %v1251
    %v1270 = vpop.permute.xlu0 %1269
    %1273 = vset.pattern.permute.xlu0 0
    %1274 = vperm.xlu0 %1273, %v1252
    %v1275 = vpop.permute.xlu0 %1274
    %1278 = vset.pattern.permute.xlu0 0
    %1279 = vperm.xlu0 %1278, %v1253
    %v1280 = vpop.permute.xlu0 %1279
    %v1282 = vmul.f32 %v1140, %v1265
    %v1283 = vmul.f32 %v1141, %v1265
    %v1284 = vmul.f32 %v1142, %v1270
    %v1285 = vmul.f32 %v1143, %v1270
    %v1286 = vmul.f32 %v1144, %v1275
    %v1287 = vmul.f32 %v1145, %v1275
    %v1288 = vmul.f32 %v1146, %v1280
    %v1289 = vmul.f32 %v1147, %v1280
    %v1290 = vadd.f32 %v1132, %v1282
    %v1291 = vadd.f32 %v1133, %v1283
    %v1292 = vadd.f32 %v1134, %v1284
    %v1293 = vadd.f32 %v1135, %v1285
    %v1294 = vadd.f32 %v1136, %v1286
    %v1295 = vadd.f32 %v1137, %v1287
    %v1296 = vadd.f32 %v1138, %v1288
    %v1297 = vadd.f32 %v1139, %v1289
    %v1298 = vmul.f32 %v1290, %v1091
    %v1299 = vmul.f32 %v1291, %v1120
    %v1300 = vmul.f32 %v1292, %v1094
    %v1301 = vmul.f32 %v1293, %v1123
    %v1302 = vmul.f32 %v1294, %v1097
    %v1303 = vmul.f32 %v1295, %v1126
    %v1304 = vmul.f32 %v1296, %v1100
    %v1305 = vmul.f32 %v1297, %v1129
    %1307 = vset.pattern.permute.xlu0 0
    %1308 = vperm.xlu0 %1307, %v1258
    %v1309 = vpop.permute.xlu0 %1308
    %1312 = vset.pattern.permute.xlu0 0
    %1313 = vperm.xlu0 %1312, %v1259
    %v1314 = vpop.permute.xlu0 %1313
    %1317 = vset.pattern.permute.xlu0 0
    %1318 = vperm.xlu0 %1317, %v1260
    %v1319 = vpop.permute.xlu0 %1318
    %1322 = vset.pattern.permute.xlu0 0
    %1323 = vperm.xlu0 %1322, %v1261
    %v1324 = vpop.permute.xlu0 %1323
    %v1326 = vmul.f32 %v1140, %v1309
    %v1327 = vmul.f32 %v1141, %v1309
    %v1328 = vmul.f32 %v1142, %v1314
    %v1329 = vmul.f32 %v1143, %v1314
    %v1330 = vmul.f32 %v1144, %v1319
    %v1331 = vmul.f32 %v1145, %v1319
    %v1332 = vmul.f32 %v1146, %v1324
    %v1333 = vmul.f32 %v1147, %v1324
    %v1334 = vadd.f32 %v1298, %v1326
    %v1335 = vadd.f32 %v1299, %v1327
    %v1336 = vadd.f32 %v1300, %v1328
    %v1337 = vadd.f32 %v1301, %v1329
    %v1338 = vadd.f32 %v1302, %v1330
    %v1339 = vadd.f32 %v1303, %v1331
    %v1340 = vadd.f32 %v1304, %v1332
    %v1341 = vadd.f32 %v1305, %v1333
    %v1342 = vmax.f32 %v1334, 0.0
    %v1343 = vmax.f32 %v1335, 0.0
    %v1344 = vmax.f32 %v1336, 0.0
    %v1345 = vmax.f32 %v1337, 0.0
    %v1346 = vmax.f32 %v1338, 0.0
    %v1347 = vmax.f32 %v1339, 0.0
    %v1348 = vmax.f32 %v1340, 0.0
    %v1349 = vmax.f32 %v1341, 0.0
    %v1350 = vld [vmem:[%s10] sm:$0x7]
    %v1351 = vld [vmem:[%s11] sm:$0x7]
    %1353 = vset.pattern.permute.xlu0 0
    %1354 = vperm.xlu0 %1353, %v1351
    %v1355 = vpop.permute.xlu0 %1354
    %v1358 = vsel %vm430, %v1350, 0
    %1360 = vmatpush.msra.mxu0 0.0
    %1361 = vmatpush.msra.mxu0 0.0
    %1362 = vmatpush.msra.mxu0 0.0
    %1363 = vmatpush.msra.mxu0 0.0
    %1364 = vmatpush.msra.mxu0 0.0
    %1365 = vmatpush.msra.mxu0 0.0
    %1366 = vmatpush.msra.mxu0 0.0
    %1367 = vmatpush.msra.mxu0 0.0
    %1368 = vmatpush.msra.mxu0 0.0
    %1369 = vmatpush.msra.mxu0 0.0
    %1370 = vmatpush.msra.mxu0 0.0
    %1371 = vmatpush.msra.mxu0 0.0
    %1372 = vmatpush.msra.mxu0 %v1348
    %1373 = vmatpush.msra.mxu0 %v1346
    %1374 = vmatpush.msra.mxu0 %v1344
    %1375 = vmatpush.msra.mxu0 %v1342
    %1376 = vmatmul.f32.gmra.mxu0 %v1358
    %v1377 = vpop.f32.mrf.mxu0
    %v1378 = vadd.f32 %v1355, %v1377
    %1379 = vdwg.mxu0
    %1380 = vmatpush.msra.mxu0 0.0
    %1381 = vmatpush.msra.mxu0 0.0
    %1382 = vmatpush.msra.mxu0 0.0
    %1383 = vmatpush.msra.mxu0 0.0
    %1384 = vmatpush.msra.mxu0 0.0
    %1385 = vmatpush.msra.mxu0 0.0
    %1386 = vmatpush.msra.mxu0 0.0
    %1387 = vmatpush.msra.mxu0 0.0
    %1388 = vmatpush.msra.mxu0 0.0
    %1389 = vmatpush.msra.mxu0 0.0
    %1390 = vmatpush.msra.mxu0 0.0
    %1391 = vmatpush.msra.mxu0 0.0
    %1392 = vmatpush.msra.mxu0 %v1349
    %1393 = vmatpush.msra.mxu0 %v1347
    %1394 = vmatpush.msra.mxu0 %v1345
    %1395 = vmatpush.msra.mxu0 %v1343
    %1396 = vmatmul.f32.gmra.mxu0 %v1358
    %v1397 = vpop.f32.mrf.mxu0
    %v1398 = vadd.f32 %v1355, %v1397
    %1399 = vdwg.mxu0
    %v1402 = vrot.slane %v1398, 4
    %vm1403 = vcmask 1043456
    %v1404 = vsel %vm1403, %v1378, %v1402
    %1406 = vst [vmem:[#allocation7] sm:$0x77] %v1404
    // Predicated region
    $region82: #{tpu_custom_call.1} parent=1 // pred_check
      _
    $region83: #{tpu_custom_call.1} parent=1 // pred_check_branch
      %1408 = sbr.rel (0) target = $region85
    $region84: #{tpu_custom_call.1} parent=1 // pred_region
      %1410 = vsyncadd [#allocation4], 0
      %s1412 = sshll.u32 [#allocation7], 4
      %s1413 = int_to_ptr.vmem [resolvable:$true] %s1412
      %s1414 = sshll.u32 %s18, 4
      %s1415 = int_to_ptr.hbm [resolvable:$true] %s1414
      %1417 = dma.vmem_to_hbm [thread:$0]  %s1413, 128, %s1415, [#allocation4]
    $region85: #{tpu_custom_call.1} parent=1 // pred_fallthru
      _
    // Predicated region
    $region86: #{tpu_custom_call.1} parent=1 // pred_check
      _
    $region87: #{tpu_custom_call.1} parent=1 // pred_check_branch
      %1419 = sbr.rel (0) target = $region89
    $region88: #{tpu_custom_call.1} parent=1 // pred_region
      %1421 = dma.done [#allocation4], 128
    $region89: #{tpu_custom_call.1} parent=1 // pred_fallthru
      _
    %1422 = vsyncpa [#allocation3], 1
    %1423 = vsyncpa [#allocation6], 1
    %1424 = vsyncpa [#allocation4], 1

</llo_original>
